<compile_context>
chip_gen: v5e
topology: v5e:2x2
jax: 0.10.0
libtpu: 0.0.40
codegen_flags: <defaults>
</compile_context>

<pallas_src>
import jax
import jax.numpy as jnp
from jax.experimental import pallas as pl
from jax.experimental.pallas import tpu as pltpu


# ----------------------------- model config ---------------------------------
INP_DIM = 5
OUT_DIM = 1
N_LAYERS = 3          # number of hidden Linear(neurons, neurons) layers
NEURONS = 100
# hidden_activation='tanh', out_layer_activation=None (Identity)


def _round_up(x, m):
    return ((x + m - 1) // m) * m


# ------------------------------ Pallas kernel -------------------------------
def _mlp_kernel(x_ref, *refs):
    """refs = (w0, b0, w1, b1, ..., wL, bL, o_ref). Full MLP forward per tile.

    x_ref: bf16 [tile_b, in_pad]; w: bf16 [in_pad, out_pad]; b: f32 [1, out_pad].
    Matmuls run on the MXU in bf16 with f32 accumulation; bias add and tanh
    stay in f32 (safe on v5e, accurate everywhere); activations are cast back
    to bf16 only to feed the next matmul.
    """
    o_ref = refs[-1]
    param_refs = refs[:-1]
    n_linear = len(param_refs) // 2

    h = x_ref[...]                                   # bf16 [tile_b, in_pad]
    for li in range(n_linear):
        w = param_refs[2 * li][...]                  # bf16 [in_p, out_p]
        b = param_refs[2 * li + 1][...]              # f32  [1, out_p]
        z = jnp.dot(h, w, preferred_element_type=jnp.float32) + b
        if li < n_linear - 1:
            h = jnp.tanh(z).astype(jnp.bfloat16)     # hidden activation = tanh
        else:
            o_ref[...] = z.astype(o_ref.dtype)       # final activation = Identity


# ------------------------------- wrapper -------------------------------------
def mlp_forward(x, params, *, tile_b=256):
    """Run the MLP on x: [B, INP_DIM] -> [B, OUT_DIM] using a Pallas kernel.

    Handles arbitrary B by zero-padding the batch to a multiple of tile_b and
    slicing the result back.  Model dims are zero-padded to (8,128)-aligned
    shapes and weights cast to bf16 inside this wrapper.
    """
    B, d_in = x.shape
    n_linear = len(params) // 2
    out_dim = params[-2].shape[1]

    # ---- zero-pad model dims to (8,128)-aligned blocks; weights -> bf16 ----
    in_pad = _round_up(d_in, 8)
    padded_params = []
    prev = in_pad
    for li in range(n_linear):
        w = params[2 * li]                            # [in, out] f32
        b = params[2 * li + 1]                        # [1, out]  f32
        o_p = _round_up(w.shape[1], 128)
        w_p = jnp.zeros((prev, o_p), jnp.float32)
        w_p = w_p.at[: w.shape[0], : w.shape[1]].set(w)
        b_p = jnp.zeros((1, o_p), jnp.float32)
        b_p = b_p.at[:, : b.shape[1]].set(b.reshape(1, -1))
        padded_params.append(w_p.astype(jnp.bfloat16))
        padded_params.append(b_p)                     # bias stays f32
        prev = o_p
    out_pad = prev

    # ---- zero-pad batch + feature dims; input -> bf16 ----------------------
    b_pad = _round_up(max(B, 1), tile_b)
    x_p = jnp.zeros((b_pad, in_pad), jnp.float32)
    x_p = x_p.at[:B, :d_in].set(x).astype(jnp.bfloat16)

    grid = (b_pad // tile_b,)

    # BlockSpecs: tile the batch; keep each (small) weight fully resident.
    in_specs = [pl.BlockSpec((tile_b, in_pad), lambda i: (i, 0))]
    for li in range(n_linear):
        w_shape = padded_params[2 * li].shape
        b_shape = padded_params[2 * li + 1].shape
        in_specs.append(pl.BlockSpec(w_shape, lambda i: (0, 0)))
        in_specs.append(pl.BlockSpec(b_shape, lambda i: (0, 0)))
    # Lane-dense output: full 128-wide padded block (unmasked vst).
    out_spec = pl.BlockSpec((tile_b, out_pad), lambda i: (i, 0))

    # Advisory cost estimate for XLA scheduling.
    flops = 2 * b_pad * sum(
        padded_params[2 * li].shape[0] * padded_params[2 * li].shape[1]
        for li in range(n_linear)
    )
    transcendentals = b_pad * out_pad * (n_linear - 1)
    bytes_accessed = int(
        x_p.size * x_p.dtype.itemsize
        + sum(int(p.size) * p.dtype.itemsize for p in padded_params)
        + b_pad * out_pad * 4
    )

    out_padded = pl.pallas_call(
        _mlp_kernel,
        out_shape=jax.ShapeDtypeStruct((b_pad, out_pad), jnp.float32),
        grid_spec=pltpu.PrefetchScalarGridSpec(
            num_scalar_prefetch=0,
            grid=grid,
            in_specs=in_specs,
            out_specs=out_spec,
        ),
        compiler_params=pltpu.CompilerParams(
            dimension_semantics=("parallel",),
        ),
        cost_estimate=pl.CostEstimate(
            flops=flops,
            transcendentals=transcendentals,
            bytes_accessed=bytes_accessed,
        ),
    )(x_p, *padded_params)

    return out_padded[:B, :out_dim]


# --------------------------- parameter construction -------------------------
def xavier_normal(key, fan_in, fan_out, dtype=jnp.float32):
    """Matches nn.init.xavier_normal_: std = sqrt(2 / (fan_in + fan_out)).
    Returned as [fan_in, fan_out] (transposed vs. PyTorch's [out, in])."""
    std = (2.0 / (fan_in + fan_out)) ** 0.5
    return std * jax.random.normal(key, (fan_in, fan_out), dtype=dtype)


def init_params(key):
    """Deterministic init mirroring net_.initialize_weights (bias = 0)."""
    dims = [INP_DIM] + [NEURONS] * (N_LAYERS + 1) + [OUT_DIM]
    params = []
    keys = jax.random.split(key, len(dims) - 1)
    for li in range(len(dims) - 1):
        fan_in, fan_out = dims[li], dims[li + 1]
        w = xavier_normal(keys[li], fan_in, fan_out)          # [in, out]
        b = jnp.zeros((1, fan_out), dtype=jnp.float32)
        params.append(w)
        params.append(b)
    return params


# ------------------------------ references (JAX) -----------------------------
def mlp_reference(x, params):
    """Exact f32 reference matching the original PyTorch module semantics."""
    n_linear = len(params) // 2
    h = x
    for li in range(n_linear):
        w = params[2 * li]
        b = params[2 * li + 1]
        h = h @ w + b
        if li < n_linear - 1:
            h = jnp.tanh(h)
    return h


def mlp_reference_bf16(x, params):
    """Reference that applies the same bf16 quantization as the kernel
    (bf16 operands, f32 accumulate, f32 tanh) — used for a tight check."""
    n_linear = len(params) // 2
    h = x.astype(jnp.bfloat16)
    for li in range(n_linear):
        w = params[2 * li].astype(jnp.bfloat16)
        b = params[2 * li + 1]
        z = jnp.dot(h, w, preferred_element_type=jnp.float32) + b
        if li < n_linear - 1:
            h = jnp.tanh(z).astype(jnp.bfloat16)
        else:
            h = z
    return h


# ----------------------------------- main ------------------------------------
if __name__ == "__main__":
    key = jax.random.PRNGKey(0)
    k_params, k_x = jax.random.split(key)

    params = init_params(k_params)

    # Non-multiple-of-tile batch exercises the padding path; pads to 512
    # (2 grid steps -> both TensorCores busy on v7x).
    B = 500
    x = jax.random.normal(k_x, (B, INP_DIM), dtype=jnp.float32)

    out = mlp_forward(x, params, tile_b=256)
    out = jax.block_until_ready(out)
    assert out.shape == (B, OUT_DIM)

    # Tight check vs. a reference with the same bf16/f32-accum quantization.
    ref_q = mlp_reference_bf16(x, params)
    assert jnp.allclose(out, ref_q, atol=2e-3, rtol=2e-3), "Pallas output mismatch (bf16 ref)"

    # Loose sanity check vs. the exact f32 module semantics (bf16 rounding only).
    ref = mlp_reference(x, params)
    assert jnp.allclose(out, ref, atol=1e-1, rtol=1e-1), "Pallas output mismatch (f32 ref)"

    print("KERNEL_OK")
</pallas_src>

<mosaic_0001>
module attributes {stable_mosaic.version = 11 : i64} {
  func.func @_mlp_kernel(%arg0: i32, %arg1: memref<256x8xbf16, #tpu.memory_space<vmem>>, %arg2: memref<8x128xbf16, #tpu.memory_space<vmem>>, %arg3: memref<1x128xf32, #tpu.memory_space<vmem>>, %arg4: memref<128x128xbf16, #tpu.memory_space<vmem>>, %arg5: memref<1x128xf32, #tpu.memory_space<vmem>>, %arg6: memref<128x128xbf16, #tpu.memory_space<vmem>>, %arg7: memref<1x128xf32, #tpu.memory_space<vmem>>, %arg8: memref<128x128xbf16, #tpu.memory_space<vmem>>, %arg9: memref<1x128xf32, #tpu.memory_space<vmem>>, %arg10: memref<128x128xbf16, #tpu.memory_space<vmem>>, %arg11: memref<1x128xf32, #tpu.memory_space<vmem>>, %arg12: memref<256x128xf32, #tpu.memory_space<vmem>>) attributes {dimension_semantics = [#tpu.dimension_semantics<parallel>], iteration_bounds = array<i64: 2>, scalar_prefetch = 0 : i64, scratch_operands = 0 : i64, tpu.core_type = #tpu.core_type<tc>, window_params = [{transform_indices = @transform_0, window_bounds = array<i64: 256, 8>}, {pipeline_mode = #tpu.pipeline_mode<synchronous>, transform_indices = @transform_1, window_bounds = array<i64: 8, 128>}, {pipeline_mode = #tpu.pipeline_mode<synchronous>, transform_indices = @transform_2, window_bounds = array<i64: 1, 128>}, {pipeline_mode = #tpu.pipeline_mode<synchronous>, transform_indices = @transform_3, window_bounds = array<i64: 128, 128>}, {pipeline_mode = #tpu.pipeline_mode<synchronous>, transform_indices = @transform_4, window_bounds = array<i64: 1, 128>}, {pipeline_mode = #tpu.pipeline_mode<synchronous>, transform_indices = @transform_5, window_bounds = array<i64: 128, 128>}, {pipeline_mode = #tpu.pipeline_mode<synchronous>, transform_indices = @transform_6, window_bounds = array<i64: 1, 128>}, {pipeline_mode = #tpu.pipeline_mode<synchronous>, transform_indices = @transform_7, window_bounds = array<i64: 128, 128>}, {pipeline_mode = #tpu.pipeline_mode<synchronous>, transform_indices = @transform_8, window_bounds = array<i64: 1, 128>}, {pipeline_mode = #tpu.pipeline_mode<synchronous>, transform_indices = @transform_9, window_bounds = array<i64: 128, 128>}, {pipeline_mode = #tpu.pipeline_mode<synchronous>, transform_indices = @transform_10, window_bounds = array<i64: 1, 128>}, {transform_indices = @transform_11, window_bounds = array<i64: 256, 128>}]} {
    %c0 = arith.constant 0 : index
    %c0_0 = arith.constant 0 : index
    %0 = vector.load %arg1[%c0, %c0_0] : memref<256x8xbf16, #tpu.memory_space<vmem>>, vector<256x8xbf16>
    %c0_1 = arith.constant 0 : index
    %c0_2 = arith.constant 0 : index
    %1 = vector.load %arg2[%c0_1, %c0_2] : memref<8x128xbf16, #tpu.memory_space<vmem>>, vector<8x128xbf16>
    %c0_3 = arith.constant 0 : index
    %c0_4 = arith.constant 0 : index
    %2 = vector.load %arg3[%c0_3, %c0_4] : memref<1x128xf32, #tpu.memory_space<vmem>>, vector<1x128xf32>
    %cst = arith.constant dense<0.000000e+00> : vector<256x128xf32>
    %3 = tpu.matmul %0, %1, %cst {dimension_numbers = #tpu.dot_dimension_numbers<[1], [0], [0], [1], [0, 0, 1, 1], [], []>} : vector<256x8xbf16>, vector<8x128xbf16>, vector<256x128xf32> -> vector<256x128xf32>
    %4 = vector.broadcast %2 : vector<1x128xf32> to vector<256x128xf32>
    %5 = arith.addf %3, %4 : vector<256x128xf32>
    %6 = math.tanh %5 : vector<256x128xf32>
    %7 = arith.truncf %6 : vector<256x128xf32> to vector<256x128xbf16>
    %c0_5 = arith.constant 0 : index
    %c0_6 = arith.constant 0 : index
    %8 = vector.load %arg4[%c0_5, %c0_6] : memref<128x128xbf16, #tpu.memory_space<vmem>>, vector<128x128xbf16>
    %c0_7 = arith.constant 0 : index
    %c0_8 = arith.constant 0 : index
    %9 = vector.load %arg5[%c0_7, %c0_8] : memref<1x128xf32, #tpu.memory_space<vmem>>, vector<1x128xf32>
    %cst_9 = arith.constant dense<0.000000e+00> : vector<256x128xf32>
    %10 = tpu.matmul %7, %8, %cst_9 {dimension_numbers = #tpu.dot_dimension_numbers<[1], [0], [0], [1], [0, 0, 1, 1], [], []>} : vector<256x128xbf16>, vector<128x128xbf16>, vector<256x128xf32> -> vector<256x128xf32>
    %11 = vector.broadcast %9 : vector<1x128xf32> to vector<256x128xf32>
    %12 = arith.addf %10, %11 : vector<256x128xf32>
    %13 = math.tanh %12 : vector<256x128xf32>
    %14 = arith.truncf %13 : vector<256x128xf32> to vector<256x128xbf16>
    %c0_10 = arith.constant 0 : index
    %c0_11 = arith.constant 0 : index
    %15 = vector.load %arg6[%c0_10, %c0_11] : memref<128x128xbf16, #tpu.memory_space<vmem>>, vector<128x128xbf16>
    %c0_12 = arith.constant 0 : index
    %c0_13 = arith.constant 0 : index
    %16 = vector.load %arg7[%c0_12, %c0_13] : memref<1x128xf32, #tpu.memory_space<vmem>>, vector<1x128xf32>
    %cst_14 = arith.constant dense<0.000000e+00> : vector<256x128xf32>
    %17 = tpu.matmul %14, %15, %cst_14 {dimension_numbers = #tpu.dot_dimension_numbers<[1], [0], [0], [1], [0, 0, 1, 1], [], []>} : vector<256x128xbf16>, vector<128x128xbf16>, vector<256x128xf32> -> vector<256x128xf32>
    %18 = vector.broadcast %16 : vector<1x128xf32> to vector<256x128xf32>
    %19 = arith.addf %17, %18 : vector<256x128xf32>
    %20 = math.tanh %19 : vector<256x128xf32>
    %21 = arith.truncf %20 : vector<256x128xf32> to vector<256x128xbf16>
    %c0_15 = arith.constant 0 : index
    %c0_16 = arith.constant 0 : index
    %22 = vector.load %arg8[%c0_15, %c0_16] : memref<128x128xbf16, #tpu.memory_space<vmem>>, vector<128x128xbf16>
    %c0_17 = arith.constant 0 : index
    %c0_18 = arith.constant 0 : index
    %23 = vector.load %arg9[%c0_17, %c0_18] : memref<1x128xf32, #tpu.memory_space<vmem>>, vector<1x128xf32>
    %cst_19 = arith.constant dense<0.000000e+00> : vector<256x128xf32>
    %24 = tpu.matmul %21, %22, %cst_19 {dimension_numbers = #tpu.dot_dimension_numbers<[1], [0], [0], [1], [0, 0, 1, 1], [], []>} : vector<256x128xbf16>, vector<128x128xbf16>, vector<256x128xf32> -> vector<256x128xf32>
    %25 = vector.broadcast %23 : vector<1x128xf32> to vector<256x128xf32>
    %26 = arith.addf %24, %25 : vector<256x128xf32>
    %27 = math.tanh %26 : vector<256x128xf32>
    %28 = arith.truncf %27 : vector<256x128xf32> to vector<256x128xbf16>
    %c0_20 = arith.constant 0 : index
    %c0_21 = arith.constant 0 : index
    %29 = vector.load %arg10[%c0_20, %c0_21] : memref<128x128xbf16, #tpu.memory_space<vmem>>, vector<128x128xbf16>
    %c0_22 = arith.constant 0 : index
    %c0_23 = arith.constant 0 : index
    %30 = vector.load %arg11[%c0_22, %c0_23] : memref<1x128xf32, #tpu.memory_space<vmem>>, vector<1x128xf32>
    %cst_24 = arith.constant dense<0.000000e+00> : vector<256x128xf32>
    %31 = tpu.matmul %28, %29, %cst_24 {dimension_numbers = #tpu.dot_dimension_numbers<[1], [0], [0], [1], [0, 0, 1, 1], [], []>} : vector<256x128xbf16>, vector<128x128xbf16>, vector<256x128xf32> -> vector<256x128xf32>
    %32 = vector.broadcast %30 : vector<1x128xf32> to vector<256x128xf32>
    %33 = arith.addf %31, %32 : vector<256x128xf32>
    %c0_25 = arith.constant 0 : index
    %c0_26 = arith.constant 0 : index
    %34 = vector.load %arg12[%c0_25, %c0_26] : memref<256x128xf32, #tpu.memory_space<vmem>>, vector<256x128xf32>
    tpu.vector_store %arg12[%c0_25, %c0_26], %33 {strides = array<i32>} : memref<256x128xf32, #tpu.memory_space<vmem>>, vector<256x128xf32>,
    return
  }
  func.func @transform_0(%arg0: i32) -> (i32, i32) {
    %c0_i32 = arith.constant 0 : i32
    %c0_i32_0 = arith.constant 0 : i32
    return %arg0, %c0_i32 : i32, i32
  }
  func.func @transform_1(%arg0: i32) -> (i32, i32) {
    %c0_i32 = arith.constant 0 : i32
    %c0_i32_0 = arith.constant 0 : i32
    %c0_i32_1 = arith.constant 0 : i32
    return %c0_i32, %c0_i32_0 : i32, i32
  }
  func.func @transform_2(%arg0: i32) -> (i32, i32) {
    %c0_i32 = arith.constant 0 : i32
    %c0_i32_0 = arith.constant 0 : i32
    %c0_i32_1 = arith.constant 0 : i32
    return %c0_i32, %c0_i32_0 : i32, i32
  }
  func.func @transform_3(%arg0: i32) -> (i32, i32) {
    %c0_i32 = arith.constant 0 : i32
    %c0_i32_0 = arith.constant 0 : i32
    %c0_i32_1 = arith.constant 0 : i32
    return %c0_i32, %c0_i32_0 : i32, i32
  }
  func.func @transform_4(%arg0: i32) -> (i32, i32) {
    %c0_i32 = arith.constant 0 : i32
    %c0_i32_0 = arith.constant 0 : i32
    %c0_i32_1 = arith.constant 0 : i32
    return %c0_i32, %c0_i32_0 : i32, i32
  }
  func.func @transform_5(%arg0: i32) -> (i32, i32) {
    %c0_i32 = arith.constant 0 : i32
    %c0_i32_0 = arith.constant 0 : i32
    %c0_i32_1 = arith.constant 0 : i32
    return %c0_i32, %c0_i32_0 : i32, i32
  }
  func.func @transform_6(%arg0: i32) -> (i32, i32) {
    %c0_i32 = arith.constant 0 : i32
    %c0_i32_0 = arith.constant 0 : i32
    %c0_i32_1 = arith.constant 0 : i32
    return %c0_i32, %c0_i32_0 : i32, i32
  }
  func.func @transform_7(%arg0: i32) -> (i32, i32) {
    %c0_i32 = arith.constant 0 : i32
    %c0_i32_0 = arith.constant 0 : i32
    %c0_i32_1 = arith.constant 0 : i32
    return %c0_i32, %c0_i32_0 : i32, i32
  }
  func.func @transform_8(%arg0: i32) -> (i32, i32) {
    %c0_i32 = arith.constant 0 : i32
    %c0_i32_0 = arith.constant 0 : i32
    %c0_i32_1 = arith.constant 0 : i32
    return %c0_i32, %c0_i32_0 : i32, i32
  }
  func.func @transform_9(%arg0: i32) -> (i32, i32) {
    %c0_i32 = arith.constant 0 : i32
    %c0_i32_0 = arith.constant 0 : i32
    %c0_i32_1 = arith.constant 0 : i32
    return %c0_i32, %c0_i32_0 : i32, i32
  }
  func.func @transform_10(%arg0: i32) -> (i32, i32) {
    %c0_i32 = arith.constant 0 : i32
    %c0_i32_0 = arith.constant 0 : i32
    %c0_i32_1 = arith.constant 0 : i32
    return %c0_i32, %c0_i32_0 : i32, i32
  }
  func.func @transform_11(%arg0: i32) -> (i32, i32) {
    %c0_i32 = arith.constant 0 : i32
    %c0_i32_0 = arith.constant 0 : i32
    return %arg0, %c0_i32 : i32, i32
  }
}

</mosaic_0001>

<llo_original>
// kernel: tpu_custom_call.1
$region0: #{tpu_custom_call.1}
  #allocation0 [shape = 'u32[]', space=smem, size = 0x4, offset = 0x4, fixed_abs, tag = 'smem constant byte address 0x4 - core index']
  #allocation1 [shape = 'u32[72,128]{1,0:T(1,128)}', space=vmem, size = 0x9000, scoped, tag = 'internal scratch']
  %s0 = inlined_call_operand.vmem [shape: bf16[512,8], index: 0, kind: input, shape index: {}]
  %s1 = inlined_call_operand.vmem [shape: bf16[8,128], index: 1, kind: input, shape index: {}]
  %s2 = inlined_call_operand.vmem [shape: f32[1,128], index: 2, kind: input, shape index: {}]
  %s3 = inlined_call_operand.vmem [shape: bf16[128,128], index: 3, kind: input, shape index: {}]
  %s4 = inlined_call_operand.vmem [shape: f32[1,128], index: 4, kind: input, shape index: {}]
  %s5 = inlined_call_operand.vmem [shape: bf16[128,128], index: 5, kind: input, shape index: {}]
  %s6 = inlined_call_operand.vmem [shape: f32[1,128], index: 6, kind: input, shape index: {}]
  %s7 = inlined_call_operand.vmem [shape: bf16[128,128], index: 7, kind: input, shape index: {}]
  %s8 = inlined_call_operand.vmem [shape: f32[1,128], index: 8, kind: input, shape index: {}]
  %s9 = inlined_call_operand.vmem [shape: bf16[128,128], index: 9, kind: input, shape index: {}]
  %s10 = inlined_call_operand.vmem [shape: f32[1,128], index: 10, kind: input, shape index: {}]
  %s11 = inlined_call_operand.hbm [shape: f32[512,128], index: 11, kind: output, shape index: {}]
  %s12 = sld [smem:[#allocation0]]
  $region77: #{tpu_custom_call.1} parent=0
    _
  %s14 = ssub.s32 1, %s12
  %s15 = scalar_select 0, %s14, %s12
  $region1: #{tpu_custom_call.1} parent=0
    #allocation2 [shape = 'u8[262144]{0}', space=vmem, size = 0x40000, scoped, tag = 'output window, operand 0']
    #allocation3 [shape = 's32[2]{0}', space=sflag, size = 0x8, scoped, tag = 'scoped memory for tpu_custom_call.1']
    %16 = vsyncpa [#allocation3], 0
    %s17 = scalar_lea.sflag [#allocation3], 1
    %18 = vsyncpa %s17, 0
    loop: start=0, step=1, limit=4
    $region2: #{tpu_custom_call.1} parent=1 // loop_pre_header
      _
    $region3: #{tpu_custom_call.1} parent=1 // loop_header
      %s20 = sphi 0, %s24
      %p21 = scmp.ge.s32.totalorder %s20, 4
      %s30 = sphi 0, %s32
      %s33 = sphi 0, %s30
      %s34 = sphi 0, %s33
      %s50 = sphi 0, %s34
      %s54 = sphi 0, %s54
      %s56 = sphi 0, %s54
      %s57 = sphi 0, %s56
      %s71 = sphi 0, %s57
      %s75 = sphi 0, %s75
      %s77 = sphi 0, %s75
      %s78 = sphi 0, %s77
      %s92 = sphi 0, %s78
      %s96 = sphi 0, %s96
      %s98 = sphi 0, %s96
      %s99 = sphi 0, %s98
      %s113 = sphi 0, %s99
      %s117 = sphi 0, %s117
      %s119 = sphi 0, %s117
      %s120 = sphi 0, %s119
      %s134 = sphi 0, %s120
      %s138 = sphi 0, %s138
      %s140 = sphi 0, %s138
      %s141 = sphi 0, %s140
      %s155 = sphi 0, %s141
      %s159 = sphi 0, %s159
      %s161 = sphi 0, %s159
      %s162 = sphi 0, %s161
      %s176 = sphi 0, %s162
      %s180 = sphi 0, %s180
      %s182 = sphi 0, %s180
      %s183 = sphi 0, %s182
      %s197 = sphi 0, %s183
      %s201 = sphi 0, %s201
      %s203 = sphi 0, %s201
      %s204 = sphi 0, %s203
      %s218 = sphi 0, %s204
      %s222 = sphi 0, %s222
      %s224 = sphi 0, %s222
      %s225 = sphi 0, %s224
      %s239 = sphi 0, %s225
      %s243 = sphi 0, %s243
      %s245 = sphi 0, %s243
      %s246 = sphi 0, %s245
      %s260 = sphi 0, %s246
      %s266 = sphi 0, %s268
      %s269 = sphi 0, %s266
      %s270 = sphi 0, %s269
      %s286 = sphi 0, %s270
    $region4: #{tpu_custom_call.1} parent=1 // loop_header_branch
      %23 = sbr.rel (%p21) target = $region8
    $region5: #{tpu_custom_call.1} parent=1 // loop_body
      %s25 = ssub.s32 %s20, 1
      %s26 = ssub.s32 %s20, 2
      %s27 = sadd.s32 %s20, 1
      %s28 = ssub.s32 %s20, %s27
      %p29 = scmp.eq.s32.totalorder %s28, 0
      %s31 = sadd.s32 %s30, 1
      %s32 = scalar_select %p29, %s30, %s31
      %p35 = pneg %p29
      %p36 = scmp.eq.s32.totalorder %s20, 1
      %p37 = por %p35, %p36
      %p38 = scmp.ne.s32.totalorder %s30, %s33
      %p39 = scmp.eq.s32.totalorder %s20, 0
      %p40 = por %p38, %p39
      %p41 = scmp.ne.s32.totalorder %s30, %s33
      %p42 = scmp.eq.s32.totalorder %s25, 1
      %p43 = por %p41, %p42
      %p44 = scmp.ne.s32.totalorder %s33, %s34
      %p45 = scmp.eq.s32.totalorder %s25, 0
      %p46 = por %p44, %p45
      %p47 = scmp.ne.s32.totalorder %s33, %s34
      %p48 = scmp.eq.s32.totalorder %s26, 1
      %p49 = por %p47, %p48
      %p51 = scmp.ne.s32.totalorder %s34, %s50
      %p52 = scmp.eq.s32.totalorder %s26, 0
      %p53 = por %p51, %p52
      %s55 = sadd.s32 %s54, 1
      %p58 = scmp.eq.s32.totalorder %s20, 1
      %p59 = scmp.ne.s32.totalorder %s54, %s56
      %p60 = scmp.eq.s32.totalorder %s20, 0
      %p61 = por %p59, %p60
      %p62 = scmp.ne.s32.totalorder %s54, %s56
      %p63 = scmp.eq.s32.totalorder %s25, 1
      %p64 = por %p62, %p63
      %p65 = scmp.ne.s32.totalorder %s56, %s57
      %p66 = scmp.eq.s32.totalorder %s25, 0
      %p67 = por %p65, %p66
      %p68 = scmp.ne.s32.totalorder %s56, %s57
      %p69 = scmp.eq.s32.totalorder %s26, 1
      %p70 = por %p68, %p69
      %p72 = scmp.ne.s32.totalorder %s57, %s71
      %p73 = scmp.eq.s32.totalorder %s26, 0
      %p74 = por %p72, %p73
      %s76 = sadd.s32 %s75, 1
      %p79 = scmp.eq.s32.totalorder %s20, 1
      %p80 = scmp.ne.s32.totalorder %s75, %s77
      %p81 = scmp.eq.s32.totalorder %s20, 0
      %p82 = por %p80, %p81
      %p83 = scmp.ne.s32.totalorder %s75, %s77
      %p84 = scmp.eq.s32.totalorder %s25, 1
      %p85 = por %p83, %p84
      %p86 = scmp.ne.s32.totalorder %s77, %s78
      %p87 = scmp.eq.s32.totalorder %s25, 0
      %p88 = por %p86, %p87
      %p89 = scmp.ne.s32.totalorder %s77, %s78
      %p90 = scmp.eq.s32.totalorder %s26, 1
      %p91 = por %p89, %p90
      %p93 = scmp.ne.s32.totalorder %s78, %s92
      %p94 = scmp.eq.s32.totalorder %s26, 0
      %p95 = por %p93, %p94
      %s97 = sadd.s32 %s96, 1
      %p100 = scmp.eq.s32.totalorder %s20, 1
      %p101 = scmp.ne.s32.totalorder %s96, %s98
      %p102 = scmp.eq.s32.totalorder %s20, 0
      %p103 = por %p101, %p102
      %p104 = scmp.ne.s32.totalorder %s96, %s98
      %p105 = scmp.eq.s32.totalorder %s25, 1
      %p106 = por %p104, %p105
      %p107 = scmp.ne.s32.totalorder %s98, %s99
      %p108 = scmp.eq.s32.totalorder %s25, 0
      %p109 = por %p107, %p108
      %p110 = scmp.ne.s32.totalorder %s98, %s99
      %p111 = scmp.eq.s32.totalorder %s26, 1
      %p112 = por %p110, %p111
      %p114 = scmp.ne.s32.totalorder %s99, %s113
      %p115 = scmp.eq.s32.totalorder %s26, 0
      %p116 = por %p114, %p115
      %s118 = sadd.s32 %s117, 1
      %p121 = scmp.eq.s32.totalorder %s20, 1
      %p122 = scmp.ne.s32.totalorder %s117, %s119
      %p123 = scmp.eq.s32.totalorder %s20, 0
      %p124 = por %p122, %p123
      %p125 = scmp.ne.s32.totalorder %s117, %s119
      %p126 = scmp.eq.s32.totalorder %s25, 1
      %p127 = por %p125, %p126
      %p128 = scmp.ne.s32.totalorder %s119, %s120
      %p129 = scmp.eq.s32.totalorder %s25, 0
      %p130 = por %p128, %p129
      %p131 = scmp.ne.s32.totalorder %s119, %s120
      %p132 = scmp.eq.s32.totalorder %s26, 1
      %p133 = por %p131, %p132
      %p135 = scmp.ne.s32.totalorder %s120, %s134
      %p136 = scmp.eq.s32.totalorder %s26, 0
      %p137 = por %p135, %p136
      %s139 = sadd.s32 %s138, 1
      %p142 = scmp.eq.s32.totalorder %s20, 1
      %p143 = scmp.ne.s32.totalorder %s138, %s140
      %p144 = scmp.eq.s32.totalorder %s20, 0
      %p145 = por %p143, %p144
      %p146 = scmp.ne.s32.totalorder %s138, %s140
      %p147 = scmp.eq.s32.totalorder %s25, 1
      %p148 = por %p146, %p147
      %p149 = scmp.ne.s32.totalorder %s140, %s141
      %p150 = scmp.eq.s32.totalorder %s25, 0
      %p151 = por %p149, %p150
      %p152 = scmp.ne.s32.totalorder %s140, %s141
      %p153 = scmp.eq.s32.totalorder %s26, 1
      %p154 = por %p152, %p153
      %p156 = scmp.ne.s32.totalorder %s141, %s155
      %p157 = scmp.eq.s32.totalorder %s26, 0
      %p158 = por %p156, %p157
      %s160 = sadd.s32 %s159, 1
      %p163 = scmp.eq.s32.totalorder %s20, 1
      %p164 = scmp.ne.s32.totalorder %s159, %s161
      %p165 = scmp.eq.s32.totalorder %s20, 0
      %p166 = por %p164, %p165
      %p167 = scmp.ne.s32.totalorder %s159, %s161
      %p168 = scmp.eq.s32.totalorder %s25, 1
      %p169 = por %p167, %p168
      %p170 = scmp.ne.s32.totalorder %s161, %s162
      %p171 = scmp.eq.s32.totalorder %s25, 0
      %p172 = por %p170, %p171
      %p173 = scmp.ne.s32.totalorder %s161, %s162
      %p174 = scmp.eq.s32.totalorder %s26, 1
      %p175 = por %p173, %p174
      %p177 = scmp.ne.s32.totalorder %s162, %s176
      %p178 = scmp.eq.s32.totalorder %s26, 0
      %p179 = por %p177, %p178
      %s181 = sadd.s32 %s180, 1
      %p184 = scmp.eq.s32.totalorder %s20, 1
      %p185 = scmp.ne.s32.totalorder %s180, %s182
      %p186 = scmp.eq.s32.totalorder %s20, 0
      %p187 = por %p185, %p186
      %p188 = scmp.ne.s32.totalorder %s180, %s182
      %p189 = scmp.eq.s32.totalorder %s25, 1
      %p190 = por %p188, %p189
      %p191 = scmp.ne.s32.totalorder %s182, %s183
      %p192 = scmp.eq.s32.totalorder %s25, 0
      %p193 = por %p191, %p192
      %p194 = scmp.ne.s32.totalorder %s182, %s183
      %p195 = scmp.eq.s32.totalorder %s26, 1
      %p196 = por %p194, %p195
      %p198 = scmp.ne.s32.totalorder %s183, %s197
      %p199 = scmp.eq.s32.totalorder %s26, 0
      %p200 = por %p198, %p199
      %s202 = sadd.s32 %s201, 1
      %p205 = scmp.eq.s32.totalorder %s20, 1
      %p206 = scmp.ne.s32.totalorder %s201, %s203
      %p207 = scmp.eq.s32.totalorder %s20, 0
      %p208 = por %p206, %p207
      %p209 = scmp.ne.s32.totalorder %s201, %s203
      %p210 = scmp.eq.s32.totalorder %s25, 1
      %p211 = por %p209, %p210
      %p212 = scmp.ne.s32.totalorder %s203, %s204
      %p213 = scmp.eq.s32.totalorder %s25, 0
      %p214 = por %p212, %p213
      %p215 = scmp.ne.s32.totalorder %s203, %s204
      %p216 = scmp.eq.s32.totalorder %s26, 1
      %p217 = por %p215, %p216
      %p219 = scmp.ne.s32.totalorder %s204, %s218
      %p220 = scmp.eq.s32.totalorder %s26, 0
      %p221 = por %p219, %p220
      %s223 = sadd.s32 %s222, 1
      %p226 = scmp.eq.s32.totalorder %s20, 1
      %p227 = scmp.ne.s32.totalorder %s222, %s224
      %p228 = scmp.eq.s32.totalorder %s20, 0
      %p229 = por %p227, %p228
      %p230 = scmp.ne.s32.totalorder %s222, %s224
      %p231 = scmp.eq.s32.totalorder %s25, 1
      %p232 = por %p230, %p231
      %p233 = scmp.ne.s32.totalorder %s224, %s225
      %p234 = scmp.eq.s32.totalorder %s25, 0
      %p235 = por %p233, %p234
      %p236 = scmp.ne.s32.totalorder %s224, %s225
      %p237 = scmp.eq.s32.totalorder %s26, 1
      %p238 = por %p236, %p237
      %p240 = scmp.ne.s32.totalorder %s225, %s239
      %p241 = scmp.eq.s32.totalorder %s26, 0
      %p242 = por %p240, %p241
      %s244 = sadd.s32 %s243, 1
      %p247 = scmp.eq.s32.totalorder %s20, 1
      %p248 = scmp.ne.s32.totalorder %s243, %s245
      %p249 = scmp.eq.s32.totalorder %s20, 0
      %p250 = por %p248, %p249
      %p251 = scmp.ne.s32.totalorder %s243, %s245
      %p252 = scmp.eq.s32.totalorder %s25, 1
      %p253 = por %p251, %p252
      %p254 = scmp.ne.s32.totalorder %s245, %s246
      %p255 = scmp.eq.s32.totalorder %s25, 0
      %p256 = por %p254, %p255
      %p257 = scmp.ne.s32.totalorder %s245, %s246
      %p258 = scmp.eq.s32.totalorder %s26, 1
      %p259 = por %p257, %p258
      %p261 = scmp.ne.s32.totalorder %s246, %s260
      %p262 = scmp.eq.s32.totalorder %s26, 0
      %p263 = por %p261, %p262
      %s264 = ssub.s32 %s20, %s27
      %p265 = scmp.eq.s32.totalorder %s264, 0
      %s267 = sadd.s32 %s266, 1
      %s268 = scalar_select %p265, %s266, %s267
      %p271 = pneg %p265
      %p272 = scmp.eq.s32.totalorder %s20, 1
      %p273 = por %p271, %p272
      %p274 = scmp.ne.s32.totalorder %s266, %s269
      %p275 = scmp.eq.s32.totalorder %s20, 0
      %p276 = por %p274, %p275
      %p277 = scmp.ne.s32.totalorder %s266, %s269
      %p278 = scmp.eq.s32.totalorder %s25, 1
      %p279 = por %p277, %p278
      %p280 = scmp.ne.s32.totalorder %s269, %s270
      %p281 = scmp.eq.s32.totalorder %s25, 0
      %p282 = por %p280, %p281
      %p283 = scmp.ne.s32.totalorder %s269, %s270
      %p284 = scmp.eq.s32.totalorder %s26, 1
      %p285 = por %p283, %p284
      %p287 = scmp.ne.s32.totalorder %s270, %s286
      %p288 = scmp.eq.s32.totalorder %s26, 0
      %p289 = por %p287, %p288
      %p290 = scmp.le.s32.totalorder 1, %s20
      %p291 = scmp.lt.s32.totalorder %s20, 3
      %p292 = pnand %p290, %p291
      %p293 = pneg %p292
      // Predicated region
      $region9: #{tpu_custom_call.1} parent=5 // pred_check
        _
      $region10: #{tpu_custom_call.1} parent=5 // pred_check_branch
        %295 = sbr.rel (%p292) target = $region12
      $region11: #{tpu_custom_call.1} parent=5 // pred_region
        %s296 = ssub.s32 %s20, 1
        // Predicated region
        $region13: #{tpu_custom_call.1} parent=11 // pred_check
          %p297 = pneg %p67
        $region14: #{tpu_custom_call.1} parent=11 // pred_check_branch
          %299 = sbr.rel (%p297) target = $region16
        $region15: #{tpu_custom_call.1} parent=11 // pred_region
          _
        $region16: #{tpu_custom_call.1} parent=11 // pred_fallthru
          _
        // Predicated region
        $region17: #{tpu_custom_call.1} parent=11 // pred_check
          %p300 = pneg %p88
        $region18: #{tpu_custom_call.1} parent=11 // pred_check_branch
          %302 = sbr.rel (%p300) target = $region20
        $region19: #{tpu_custom_call.1} parent=11 // pred_region
          _
        $region20: #{tpu_custom_call.1} parent=11 // pred_fallthru
          _
        // Predicated region
        $region21: #{tpu_custom_call.1} parent=11 // pred_check
          %p303 = pneg %p109
        $region22: #{tpu_custom_call.1} parent=11 // pred_check_branch
          %305 = sbr.rel (%p303) target = $region24
        $region23: #{tpu_custom_call.1} parent=11 // pred_region
          _
        $region24: #{tpu_custom_call.1} parent=11 // pred_fallthru
          _
        // Predicated region
        $region25: #{tpu_custom_call.1} parent=11 // pred_check
          %p306 = pneg %p130
        $region26: #{tpu_custom_call.1} parent=11 // pred_check_branch
          %308 = sbr.rel (%p306) target = $region28
        $region27: #{tpu_custom_call.1} parent=11 // pred_region
          _
        $region28: #{tpu_custom_call.1} parent=11 // pred_fallthru
          _
        // Predicated region
        $region29: #{tpu_custom_call.1} parent=11 // pred_check
          %p309 = pneg %p151
        $region30: #{tpu_custom_call.1} parent=11 // pred_check_branch
          %311 = sbr.rel (%p309) target = $region32
        $region31: #{tpu_custom_call.1} parent=11 // pred_region
          _
        $region32: #{tpu_custom_call.1} parent=11 // pred_fallthru
          _
        // Predicated region
        $region33: #{tpu_custom_call.1} parent=11 // pred_check
          %p312 = pneg %p172
        $region34: #{tpu_custom_call.1} parent=11 // pred_check_branch
          %314 = sbr.rel (%p312) target = $region36
        $region35: #{tpu_custom_call.1} parent=11 // pred_region
          _
        $region36: #{tpu_custom_call.1} parent=11 // pred_fallthru
          _
        // Predicated region
        $region37: #{tpu_custom_call.1} parent=11 // pred_check
          %p315 = pneg %p193
        $region38: #{tpu_custom_call.1} parent=11 // pred_check_branch
          %317 = sbr.rel (%p315) target = $region40
        $region39: #{tpu_custom_call.1} parent=11 // pred_region
          _
        $region40: #{tpu_custom_call.1} parent=11 // pred_fallthru
          _
        // Predicated region
        $region41: #{tpu_custom_call.1} parent=11 // pred_check
          %p318 = pneg %p214
        $region42: #{tpu_custom_call.1} parent=11 // pred_check_branch
          %320 = sbr.rel (%p318) target = $region44
        $region43: #{tpu_custom_call.1} parent=11 // pred_region
          _
        $region44: #{tpu_custom_call.1} parent=11 // pred_fallthru
          _
        // Predicated region
        $region45: #{tpu_custom_call.1} parent=11 // pred_check
          %p321 = pneg %p235
        $region46: #{tpu_custom_call.1} parent=11 // pred_check_branch
          %323 = sbr.rel (%p321) target = $region48
        $region47: #{tpu_custom_call.1} parent=11 // pred_region
          _
        $region48: #{tpu_custom_call.1} parent=11 // pred_fallthru
          _
        // Predicated region
        $region49: #{tpu_custom_call.1} parent=11 // pred_check
          %p324 = pneg %p256
        $region50: #{tpu_custom_call.1} parent=11 // pred_check_branch
          %326 = sbr.rel (%p324) target = $region52
        $region51: #{tpu_custom_call.1} parent=11 // pred_region
          _
        $region52: #{tpu_custom_call.1} parent=11 // pred_fallthru
          _
      $region12: #{tpu_custom_call.1} parent=5 // pred_fallthru
        _
      %p327 = scmp.lt.s32.totalorder %s20, 2
      // Predicated region
      $region53: #{tpu_custom_call.1} parent=5 // pred_check
        %p328 = pneg %p327
      $region54: #{tpu_custom_call.1} parent=5 // pred_check_branch
        %330 = sbr.rel (%p328) target = $region56
      $region55: #{tpu_custom_call.1} parent=5 // pred_region
        // Predicated region
        $region57: #{tpu_custom_call.1} parent=55 // pred_check
          %p331 = pneg %p40
        $region58: #{tpu_custom_call.1} parent=55 // pred_check_branch
          %333 = sbr.rel (%p331) target = $region60
        $region59: #{tpu_custom_call.1} parent=55 // pred_region
          %s334 = smul.u32 32, %s20
          %p335 = scmp.lt.s32.totalorder %s334, 63
          %s336 = scalar_select %p335, %s334, 63
          %s337 = smul.addr %s336, 4
          %s338 = scalar_lea.vmem %s0, %s337
          %s339 = smul.u32 32, %s20
        $region60: #{tpu_custom_call.1} parent=55 // pred_fallthru
          _
      $region56: #{tpu_custom_call.1} parent=5 // pred_fallthru
        _
      %p340 = scmp.le.s32.totalorder 1, %s20
      %p341 = scmp.lt.s32.totalorder %s20, 3
      %p342 = pnand %p340, %p341
      %p343 = pneg %p342
      // Predicated region
      $region61: #{tpu_custom_call.1} parent=5 // pred_check
        _
      $region62: #{tpu_custom_call.1} parent=5 // pred_check_branch
        %345 = sbr.rel (%p342) target = $region64
      $region63: #{tpu_custom_call.1} parent=5 // pred_region
        %s346 = ssub.s32 %s20, 1
        %s347 = smul.u32 32, %s25
        %p348 = scmp.lt.s32.totalorder %s347, 63
        %s349 = scalar_select %p348, %s347, 63
        %s350 = smul.addr %s349, 4
        %s351 = scalar_lea.vmem %s0, %s350
        %p352 = pneg %p46
        %p353 = pneg %p43
        %p354 = pneg %p67
        %p355 = pneg %p64
        %p356 = pneg %p88
        %p357 = pneg %p85
        %p358 = pneg %p109
        %p359 = pneg %p106
        %p360 = pneg %p130
        %p361 = pneg %p127
        %p362 = pneg %p151
        %p363 = pneg %p148
        %p364 = pneg %p172
        %p365 = pneg %p169
        %p366 = pneg %p193
        %p367 = pneg %p190
        %p368 = pneg %p214
        %p369 = pneg %p211
        %p370 = pneg %p235
        %p371 = pneg %p232
        %p372 = pneg %p256
        %p373 = pneg %p253
        %p374 = pneg %p282
        %p375 = pneg %p279
        %s376 = sand.u32 %s269, 1
        %s377 = scalar_lea.sflag [#allocation3], %s376
        %s378 = sand.u32 %s269, 1
        %s379 = smul.addr %s378, 256
        %s380 = scalar_lea.vmem [#allocation2], %s379
        %s381 = smul.u32 32, %s25
        %p382 = scmp.lt.s32.totalorder %s381, 63
        %s383 = scalar_select %p382, %s381, 63
        %s384 = smul.addr %s383, 4
        %s385 = scalar_lea.vmem %s0, %s384
        %s386 = smul.u32 32, %s25
        %s387 = smul.u32 32, %s25
        %v389 = vld [vmem:[%s385] sm:$0xf]
        %v390 = vld [vmem:[%s385 + $0x4] sm:$0xf]
        %v391 = vld [vmem:[%s385 + $0x8] sm:$0xf]
        %v392 = vld [vmem:[%s385 + $0xc] sm:$0xf]
        %v393 = vld [vmem:[%s385 + $0x10] sm:$0xf]
        %v394 = vld [vmem:[%s385 + $0x14] sm:$0xf]
        %v395 = vld [vmem:[%s385 + $0x18] sm:$0xf]
        %v396 = vld [vmem:[%s385 + $0x1c] sm:$0xf]
        %v397 = vld [vmem:[%s385 + $0x20] sm:$0xf]
        %v398 = vld [vmem:[%s385 + $0x24] sm:$0xf]
        %v399 = vld [vmem:[%s385 + $0x28] sm:$0xf]
        %v400 = vld [vmem:[%s385 + $0x2c] sm:$0xf]
        %v401 = vld [vmem:[%s385 + $0x30] sm:$0xf]
        %v402 = vld [vmem:[%s385 + $0x34] sm:$0xf]
        %v403 = vld [vmem:[%s385 + $0x38] sm:$0xf]
        %v404 = vld [vmem:[%s385 + $0x3c] sm:$0xf]
        %v405 = vld [vmem:[%s385 + $0x40] sm:$0xf]
        %v406 = vld [vmem:[%s385 + $0x44] sm:$0xf]
        %v407 = vld [vmem:[%s385 + $0x48] sm:$0xf]
        %v408 = vld [vmem:[%s385 + $0x4c] sm:$0xf]
        %v409 = vld [vmem:[%s385 + $0x50] sm:$0xf]
        %v410 = vld [vmem:[%s385 + $0x54] sm:$0xf]
        %v411 = vld [vmem:[%s385 + $0x58] sm:$0xf]
        %v412 = vld [vmem:[%s385 + $0x5c] sm:$0xf]
        %v413 = vld [vmem:[%s385 + $0x60] sm:$0xf]
        %v414 = vld [vmem:[%s385 + $0x64] sm:$0xf]
        %v415 = vld [vmem:[%s385 + $0x68] sm:$0xf]
        %v416 = vld [vmem:[%s385 + $0x6c] sm:$0xf]
        %v417 = vld [vmem:[%s385 + $0x70] sm:$0xf]
        %v418 = vld [vmem:[%s385 + $0x74] sm:$0xf]
        %v419 = vld [vmem:[%s385 + $0x78] sm:$0xf]
        %v420 = vld [vmem:[%s385 + $0x7c] sm:$0xf]
        %v421 = vld [vmem:[%s1] sm:$0xf]
        %v422 = vld [vmem:[%s2] sm:$0x1]
        %v424 = vperm.slane %v422, 0
        %v458 = vunpack.c.l.b16 %v389
        %v459 = vunpack.c.l.b16 %v390
        %v460 = vunpack.c.l.b16 %v391
        %v461 = vunpack.c.l.b16 %v392
        %v462 = vunpack.c.l.b16 %v393
        %v463 = vunpack.c.l.b16 %v394
        %v464 = vunpack.c.l.b16 %v395
        %v465 = vunpack.c.l.b16 %v396
        %v466 = vunpack.c.l.b16 %v397
        %v467 = vunpack.c.l.b16 %v398
        %v468 = vunpack.c.l.b16 %v399
        %v469 = vunpack.c.l.b16 %v400
        %v470 = vunpack.c.l.b16 %v401
        %v471 = vunpack.c.l.b16 %v402
        %v472 = vunpack.c.l.b16 %v403
        %v473 = vunpack.c.l.b16 %v404
        %v474 = vunpack.c.l.b16 %v405
        %v475 = vunpack.c.l.b16 %v406
        %v476 = vunpack.c.l.b16 %v407
        %v477 = vunpack.c.l.b16 %v408
        %v478 = vunpack.c.l.b16 %v409
        %v479 = vunpack.c.l.b16 %v410
        %v480 = vunpack.c.l.b16 %v411
        %v481 = vunpack.c.l.b16 %v412
        %v482 = vunpack.c.l.b16 %v413
        %v483 = vunpack.c.l.b16 %v414
        %v484 = vunpack.c.l.b16 %v415
        %v485 = vunpack.c.l.b16 %v416
        %v486 = vunpack.c.l.b16 %v417
        %v487 = vunpack.c.l.b16 %v418
        %v488 = vunpack.c.l.b16 %v419
        %v489 = vunpack.c.l.b16 %v420
        %v490 = vpack.c.b16 %v459, %v458
        %v491 = vpack.c.b16 %v461, %v460
        %v492 = vpack.c.b16 %v463, %v462
        %v493 = vpack.c.b16 %v465, %v464
        %v494 = vpack.c.b16 %v467, %v466
        %v495 = vpack.c.b16 %v469, %v468
        %v496 = vpack.c.b16 %v471, %v470
        %v497 = vpack.c.b16 %v473, %v472
        %v498 = vpack.c.b16 %v475, %v474
        %v499 = vpack.c.b16 %v477, %v476
        %v500 = vpack.c.b16 %v479, %v478
        %v501 = vpack.c.b16 %v481, %v480
        %v502 = vpack.c.b16 %v483, %v482
        %v503 = vpack.c.b16 %v485, %v484
        %v504 = vpack.c.b16 %v487, %v486
        %v505 = vpack.c.b16 %v489, %v488
        %vm506 = vcmask 64512
        %v508 = vsel %vm506, %v490, 0
        %v511 = vsel %vm506, %v491, 0
        %v514 = vsel %vm506, %v492, 0
        %v517 = vsel %vm506, %v493, 0
        %v520 = vsel %vm506, %v494, 0
        %v523 = vsel %vm506, %v495, 0
        %v526 = vsel %vm506, %v496, 0
        %v529 = vsel %vm506, %v497, 0
        %v532 = vsel %vm506, %v498, 0
        %v535 = vsel %vm506, %v499, 0
        %v538 = vsel %vm506, %v500, 0
        %v541 = vsel %vm506, %v501, 0
        %v544 = vsel %vm506, %v502, 0
        %v547 = vsel %vm506, %v503, 0
        %v550 = vsel %vm506, %v504, 0
        %v553 = vsel %vm506, %v505, 0
        %vm555 = vcmask 1043456
        %v557 = vsel %vm555, %v421, 0
        %559 = vmatpush.bf16.msra.mxu0 0
        %560 = vmatpush.bf16.msra.mxu0 0
        %561 = vmatpush.bf16.msra.mxu0 0
        %562 = vmatpush.bf16.msra.mxu0 0
        %563 = vmatpush.bf16.msra.mxu0 0
        %564 = vmatpush.bf16.msra.mxu0 0
        %565 = vmatpush.bf16.msra.mxu0 0
        %566 = vmatpush.bf16.msra.mxu0 %v557
        %567 = vmatmul.bf16.gmra.mxu0 %v508
        %v568 = vpop.f32.mrf.mxu0
        %v569 = vadd.f32 %v424, %v568
        %v570 = vpop.f32.mrf.mxu0
        %v571 = vadd.f32 %v424, %v570
        %572 = vmatmul.bf16.gmra.mxu0 %v511
        %v573 = vpop.f32.mrf.mxu0
        %v574 = vadd.f32 %v424, %v573
        %v575 = vpop.f32.mrf.mxu0
        %v576 = vadd.f32 %v424, %v575
        %577 = vmatmul.bf16.gmra.mxu0 %v514
        %v578 = vpop.f32.mrf.mxu0
        %v579 = vadd.f32 %v424, %v578
        %v580 = vpop.f32.mrf.mxu0
        %v581 = vadd.f32 %v424, %v580
        %582 = vmatmul.bf16.gmra.mxu0 %v517
        %v583 = vpop.f32.mrf.mxu0
        %v584 = vadd.f32 %v424, %v583
        %v585 = vpop.f32.mrf.mxu0
        %v586 = vadd.f32 %v424, %v585
        %587 = vmatmul.bf16.gmra.mxu0 %v520
        %v588 = vpop.f32.mrf.mxu0
        %v589 = vadd.f32 %v424, %v588
        %v590 = vpop.f32.mrf.mxu0
        %v591 = vadd.f32 %v424, %v590
        %592 = vmatmul.bf16.gmra.mxu0 %v523
        %v593 = vpop.f32.mrf.mxu0
        %v594 = vadd.f32 %v424, %v593
        %v595 = vpop.f32.mrf.mxu0
        %v596 = vadd.f32 %v424, %v595
        %597 = vmatmul.bf16.gmra.mxu0 %v526
        %v598 = vpop.f32.mrf.mxu0
        %v599 = vadd.f32 %v424, %v598
        %v600 = vpop.f32.mrf.mxu0
        %v601 = vadd.f32 %v424, %v600
        %602 = vmatmul.bf16.gmra.mxu0 %v529
        %v603 = vpop.f32.mrf.mxu0
        %v604 = vadd.f32 %v424, %v603
        %v605 = vpop.f32.mrf.mxu0
        %v606 = vadd.f32 %v424, %v605
        %607 = vmatmul.bf16.gmra.mxu0 %v532
        %v608 = vpop.f32.mrf.mxu0
        %v609 = vadd.f32 %v424, %v608
        %v610 = vpop.f32.mrf.mxu0
        %v611 = vadd.f32 %v424, %v610
        %612 = vmatmul.bf16.gmra.mxu0 %v535
        %v613 = vpop.f32.mrf.mxu0
        %v614 = vadd.f32 %v424, %v613
        %v615 = vpop.f32.mrf.mxu0
        %v616 = vadd.f32 %v424, %v615
        %617 = vmatmul.bf16.gmra.mxu0 %v538
        %v618 = vpop.f32.mrf.mxu0
        %v619 = vadd.f32 %v424, %v618
        %v620 = vpop.f32.mrf.mxu0
        %v621 = vadd.f32 %v424, %v620
        %622 = vmatmul.bf16.gmra.mxu0 %v541
        %v623 = vpop.f32.mrf.mxu0
        %v624 = vadd.f32 %v424, %v623
        %v625 = vpop.f32.mrf.mxu0
        %v626 = vadd.f32 %v424, %v625
        %627 = vmatmul.bf16.gmra.mxu0 %v544
        %v628 = vpop.f32.mrf.mxu0
        %v629 = vadd.f32 %v424, %v628
        %v630 = vpop.f32.mrf.mxu0
        %v631 = vadd.f32 %v424, %v630
        %632 = vmatmul.bf16.gmra.mxu0 %v547
        %v633 = vpop.f32.mrf.mxu0
        %v634 = vadd.f32 %v424, %v633
        %v635 = vpop.f32.mrf.mxu0
        %v636 = vadd.f32 %v424, %v635
        %637 = vmatmul.bf16.gmra.mxu0 %v550
        %v638 = vpop.f32.mrf.mxu0
        %v639 = vadd.f32 %v424, %v638
        %v640 = vpop.f32.mrf.mxu0
        %v641 = vadd.f32 %v424, %v640
        %642 = vmatmul.bf16.gmra.mxu0 %v553
        %v643 = vpop.f32.mrf.mxu0
        %v644 = vadd.f32 %v424, %v643
        %v645 = vpop.f32.mrf.mxu0
        %v646 = vadd.f32 %v424, %v645
        %647 = vdwg.mxu0
        %v648 = vtanh.pop %v569
        %v649 = vtanh.pop %v571
        %v650 = vtanh.pop %v574
        %v651 = vtanh.pop %v576
        %v652 = vtanh.pop %v579
        %v653 = vtanh.pop %v581
        %v654 = vtanh.pop %v584
        %v655 = vtanh.pop %v586
        %v656 = vtanh.pop %v589
        %v657 = vtanh.pop %v591
        %v658 = vtanh.pop %v594
        %v659 = vtanh.pop %v596
        %v660 = vtanh.pop %v599
        %v661 = vtanh.pop %v601
        %v662 = vtanh.pop %v604
        %v663 = vtanh.pop %v606
        %v664 = vtanh.pop %v609
        %v665 = vtanh.pop %v611
        %v666 = vtanh.pop %v614
        %v667 = vtanh.pop %v616
        %v668 = vtanh.pop %v619
        %v669 = vtanh.pop %v621
        %v670 = vtanh.pop %v624
        %v671 = vtanh.pop %v626
        %v672 = vtanh.pop %v629
        %v673 = vtanh.pop %v631
        %v674 = vtanh.pop %v634
        %v675 = vtanh.pop %v636
        %v676 = vtanh.pop %v639
        %v677 = vtanh.pop %v641
        %v678 = vtanh.pop %v644
        %v679 = vtanh.pop %v646
        %v680 = vpack.c.bf16 %v649, %v648
        %v681 = vpack.c.bf16 %v651, %v650
        %v682 = vpack.c.bf16 %v653, %v652
        %v683 = vpack.c.bf16 %v655, %v654
        %v684 = vpack.c.bf16 %v657, %v656
        %v685 = vpack.c.bf16 %v659, %v658
        %v686 = vpack.c.bf16 %v661, %v660
        %v687 = vpack.c.bf16 %v663, %v662
        %v688 = vpack.c.bf16 %v665, %v664
        %v689 = vpack.c.bf16 %v667, %v666
        %v690 = vpack.c.bf16 %v669, %v668
        %v691 = vpack.c.bf16 %v671, %v670
        %v692 = vpack.c.bf16 %v673, %v672
        %v693 = vpack.c.bf16 %v675, %v674
        %v694 = vpack.c.bf16 %v677, %v676
        %v695 = vpack.c.bf16 %v679, %v678
        %v696 = vld [vmem:[%s3] sm:$0xf]
        %v697 = vld [vmem:[%s3 + $0x4] sm:$0xf]
        %v698 = vld [vmem:[%s3 + $0x8] sm:$0xf]
        %v699 = vld [vmem:[%s3 + $0xc] sm:$0xf]
        %v700 = vld [vmem:[%s3 + $0x10] sm:$0xf]
        %v701 = vld [vmem:[%s3 + $0x14] sm:$0xf]
        %v702 = vld [vmem:[%s3 + $0x18] sm:$0xf]
        %v703 = vld [vmem:[%s3 + $0x1c] sm:$0xf]
        %v704 = vld [vmem:[%s3 + $0x20] sm:$0xf]
        %v705 = vld [vmem:[%s3 + $0x24] sm:$0xf]
        %v706 = vld [vmem:[%s3 + $0x28] sm:$0xf]
        %v707 = vld [vmem:[%s3 + $0x2c] sm:$0xf]
        %v708 = vld [vmem:[%s3 + $0x30] sm:$0xf]
        %v709 = vld [vmem:[%s3 + $0x34] sm:$0xf]
        %v710 = vld [vmem:[%s3 + $0x38] sm:$0xf]
        %v711 = vld [vmem:[%s3 + $0x3c] sm:$0xf]
        %v712 = vld [vmem:[%s4] sm:$0x1]
        %v714 = vperm.slane %v712, 0
        %v732 = vunpack.c.l.b16 %v696
        %v733 = vunpack.c.l.b16 %v697
        %v734 = vunpack.c.l.b16 %v698
        %v735 = vunpack.c.l.b16 %v699
        %v736 = vunpack.c.l.b16 %v700
        %v737 = vunpack.c.l.b16 %v701
        %v738 = vunpack.c.l.b16 %v702
        %v739 = vunpack.c.l.b16 %v703
        %v740 = vunpack.c.l.b16 %v704
        %v741 = vunpack.c.l.b16 %v705
        %v742 = vunpack.c.l.b16 %v706
        %v743 = vunpack.c.l.b16 %v707
        %v744 = vunpack.c.l.b16 %v708
        %v745 = vunpack.c.l.b16 %v709
        %v746 = vunpack.c.l.b16 %v710
        %v747 = vunpack.c.l.b16 %v711
        %v748 = vpack.c.b16 %v733, %v732
        %v749 = vpack.c.b16 %v735, %v734
        %v750 = vpack.c.b16 %v737, %v736
        %v751 = vpack.c.b16 %v739, %v738
        %v752 = vpack.c.b16 %v741, %v740
        %v753 = vpack.c.b16 %v743, %v742
        %v754 = vpack.c.b16 %v745, %v744
        %v755 = vpack.c.b16 %v747, %v746
        %764 = vmatpush.bf16.msra.mxu0 %v755
        %765 = vmatpush.bf16.msra.mxu0 %v754
        %766 = vmatpush.bf16.msra.mxu0 %v753
        %767 = vmatpush.bf16.msra.mxu0 %v752
        %768 = vmatpush.bf16.msra.mxu0 %v751
        %769 = vmatpush.bf16.msra.mxu0 %v750
        %770 = vmatpush.bf16.msra.mxu0 %v749
        %771 = vmatpush.bf16.msra.mxu0 %v748
        %772 = vmatmul.bf16.gmra.mxu0 %v680
        %v773 = vpop.f32.mrf.mxu0
        %v774 = vadd.f32 %v714, %v773
        %v775 = vpop.f32.mrf.mxu0
        %v776 = vadd.f32 %v714, %v775
        %777 = vmatmul.bf16.gmra.mxu0 %v681
        %v778 = vpop.f32.mrf.mxu0
        %v779 = vadd.f32 %v714, %v778
        %v780 = vpop.f32.mrf.mxu0
        %v781 = vadd.f32 %v714, %v780
        %782 = vmatmul.bf16.gmra.mxu0 %v682
        %v783 = vpop.f32.mrf.mxu0
        %v784 = vadd.f32 %v714, %v783
        %v785 = vpop.f32.mrf.mxu0
        %v786 = vadd.f32 %v714, %v785
        %787 = vmatmul.bf16.gmra.mxu0 %v683
        %v788 = vpop.f32.mrf.mxu0
        %v789 = vadd.f32 %v714, %v788
        %v790 = vpop.f32.mrf.mxu0
        %v791 = vadd.f32 %v714, %v790
        %792 = vmatmul.bf16.gmra.mxu0 %v684
        %v793 = vpop.f32.mrf.mxu0
        %v794 = vadd.f32 %v714, %v793
        %v795 = vpop.f32.mrf.mxu0
        %v796 = vadd.f32 %v714, %v795
        %797 = vmatmul.bf16.gmra.mxu0 %v685
        %v798 = vpop.f32.mrf.mxu0
        %v799 = vadd.f32 %v714, %v798
        %v800 = vpop.f32.mrf.mxu0
        %v801 = vadd.f32 %v714, %v800
        %802 = vmatmul.bf16.gmra.mxu0 %v686
        %v803 = vpop.f32.mrf.mxu0
        %v804 = vadd.f32 %v714, %v803
        %v805 = vpop.f32.mrf.mxu0
        %v806 = vadd.f32 %v714, %v805
        %807 = vmatmul.bf16.gmra.mxu0 %v687
        %v808 = vpop.f32.mrf.mxu0
        %v809 = vadd.f32 %v714, %v808
        %v810 = vpop.f32.mrf.mxu0
        %v811 = vadd.f32 %v714, %v810
        %812 = vmatmul.bf16.gmra.mxu0 %v688
        %v813 = vpop.f32.mrf.mxu0
        %v814 = vadd.f32 %v714, %v813
        %v815 = vpop.f32.mrf.mxu0
        %v816 = vadd.f32 %v714, %v815
        %817 = vmatmul.bf16.gmra.mxu0 %v689
        %v818 = vpop.f32.mrf.mxu0
        %v819 = vadd.f32 %v714, %v818
        %v820 = vpop.f32.mrf.mxu0
        %v821 = vadd.f32 %v714, %v820
        %822 = vmatmul.bf16.gmra.mxu0 %v690
        %v823 = vpop.f32.mrf.mxu0
        %v824 = vadd.f32 %v714, %v823
        %v825 = vpop.f32.mrf.mxu0
        %v826 = vadd.f32 %v714, %v825
        %827 = vmatmul.bf16.gmra.mxu0 %v691
        %v828 = vpop.f32.mrf.mxu0
        %v829 = vadd.f32 %v714, %v828
        %v830 = vpop.f32.mrf.mxu0
        %v831 = vadd.f32 %v714, %v830
        %832 = vmatmul.bf16.gmra.mxu0 %v692
        %v833 = vpop.f32.mrf.mxu0
        %v834 = vadd.f32 %v714, %v833
        %v835 = vpop.f32.mrf.mxu0
        %v836 = vadd.f32 %v714, %v835
        %837 = vmatmul.bf16.gmra.mxu0 %v693
        %v838 = vpop.f32.mrf.mxu0
        %v839 = vadd.f32 %v714, %v838
        %v840 = vpop.f32.mrf.mxu0
        %v841 = vadd.f32 %v714, %v840
        %842 = vmatmul.bf16.gmra.mxu0 %v694
        %v843 = vpop.f32.mrf.mxu0
        %v844 = vadd.f32 %v714, %v843
        %v845 = vpop.f32.mrf.mxu0
        %v846 = vadd.f32 %v714, %v845
        %847 = vmatmul.bf16.gmra.mxu0 %v695
        %v848 = vpop.f32.mrf.mxu0
        %v849 = vadd.f32 %v714, %v848
        %v850 = vpop.f32.mrf.mxu0
        %v851 = vadd.f32 %v714, %v850
        %852 = vdwg.mxu0
        %v853 = vtanh.pop %v774
        %v854 = vtanh.pop %v776
        %v855 = vtanh.pop %v779
        %v856 = vtanh.pop %v781
        %v857 = vtanh.pop %v784
        %v858 = vtanh.pop %v786
        %v859 = vtanh.pop %v789
        %v860 = vtanh.pop %v791
        %v861 = vtanh.pop %v794
        %v862 = vtanh.pop %v796
        %v863 = vtanh.pop %v799
        %v864 = vtanh.pop %v801
        %v865 = vtanh.pop %v804
        %v866 = vtanh.pop %v806
        %v867 = vtanh.pop %v809
        %v868 = vtanh.pop %v811
        %v869 = vtanh.pop %v814
        %v870 = vtanh.pop %v816
        %v871 = vtanh.pop %v819
        %v872 = vtanh.pop %v821
        %v873 = vtanh.pop %v824
        %v874 = vtanh.pop %v826
        %v875 = vtanh.pop %v829
        %v876 = vtanh.pop %v831
        %v877 = vtanh.pop %v834
        %v878 = vtanh.pop %v836
        %v879 = vtanh.pop %v839
        %v880 = vtanh.pop %v841
        %v881 = vtanh.pop %v844
        %v882 = vtanh.pop %v846
        %v883 = vtanh.pop %v849
        %v884 = vtanh.pop %v851
        %v885 = vpack.c.bf16 %v854, %v853
        %v886 = vpack.c.bf16 %v856, %v855
        %v887 = vpack.c.bf16 %v858, %v857
        %v888 = vpack.c.bf16 %v860, %v859
        %v889 = vpack.c.bf16 %v862, %v861
        %v890 = vpack.c.bf16 %v864, %v863
        %v891 = vpack.c.bf16 %v866, %v865
        %v892 = vpack.c.bf16 %v868, %v867
        %v893 = vpack.c.bf16 %v870, %v869
        %v894 = vpack.c.bf16 %v872, %v871
        %v895 = vpack.c.bf16 %v874, %v873
        %v896 = vpack.c.bf16 %v876, %v875
        %v897 = vpack.c.bf16 %v878, %v877
        %v898 = vpack.c.bf16 %v880, %v879
        %v899 = vpack.c.bf16 %v882, %v881
        %v900 = vpack.c.bf16 %v884, %v883
        %v901 = vld [vmem:[%s5] sm:$0xf]
        %v902 = vld [vmem:[%s5 + $0x4] sm:$0xf]
        %v903 = vld [vmem:[%s5 + $0x8] sm:$0xf]
        %v904 = vld [vmem:[%s5 + $0xc] sm:$0xf]
        %v905 = vld [vmem:[%s5 + $0x10] sm:$0xf]
        %v906 = vld [vmem:[%s5 + $0x14] sm:$0xf]
        %v907 = vld [vmem:[%s5 + $0x18] sm:$0xf]
        %v908 = vld [vmem:[%s5 + $0x1c] sm:$0xf]
        %v909 = vld [vmem:[%s5 + $0x20] sm:$0xf]
        %v910 = vld [vmem:[%s5 + $0x24] sm:$0xf]
        %v911 = vld [vmem:[%s5 + $0x28] sm:$0xf]
        %v912 = vld [vmem:[%s5 + $0x2c] sm:$0xf]
        %v913 = vld [vmem:[%s5 + $0x30] sm:$0xf]
        %v914 = vld [vmem:[%s5 + $0x34] sm:$0xf]
        %v915 = vld [vmem:[%s5 + $0x38] sm:$0xf]
        %v916 = vld [vmem:[%s5 + $0x3c] sm:$0xf]
        %v917 = vld [vmem:[%s6] sm:$0x1]
        %v919 = vperm.slane %v917, 0
        %v937 = vunpack.c.l.b16 %v901
        %v938 = vunpack.c.l.b16 %v902
        %v939 = vunpack.c.l.b16 %v903
        %v940 = vunpack.c.l.b16 %v904
        %v941 = vunpack.c.l.b16 %v905
        %v942 = vunpack.c.l.b16 %v906
        %v943 = vunpack.c.l.b16 %v907
        %v944 = vunpack.c.l.b16 %v908
        %v945 = vunpack.c.l.b16 %v909
        %v946 = vunpack.c.l.b16 %v910
        %v947 = vunpack.c.l.b16 %v911
        %v948 = vunpack.c.l.b16 %v912
        %v949 = vunpack.c.l.b16 %v913
        %v950 = vunpack.c.l.b16 %v914
        %v951 = vunpack.c.l.b16 %v915
        %v952 = vunpack.c.l.b16 %v916
        %v953 = vpack.c.b16 %v938, %v937
        %v954 = vpack.c.b16 %v940, %v939
        %v955 = vpack.c.b16 %v942, %v941
        %v956 = vpack.c.b16 %v944, %v943
        %v957 = vpack.c.b16 %v946, %v945
        %v958 = vpack.c.b16 %v948, %v947
        %v959 = vpack.c.b16 %v950, %v949
        %v960 = vpack.c.b16 %v952, %v951
        %969 = vmatpush.bf16.msra.mxu0 %v960
        %970 = vmatpush.bf16.msra.mxu0 %v959
        %971 = vmatpush.bf16.msra.mxu0 %v958
        %972 = vmatpush.bf16.msra.mxu0 %v957
        %973 = vmatpush.bf16.msra.mxu0 %v956
        %974 = vmatpush.bf16.msra.mxu0 %v955
        %975 = vmatpush.bf16.msra.mxu0 %v954
        %976 = vmatpush.bf16.msra.mxu0 %v953
        %977 = vmatmul.bf16.gmra.mxu0 %v885
        %v978 = vpop.f32.mrf.mxu0
        %v979 = vadd.f32 %v919, %v978
        %v980 = vpop.f32.mrf.mxu0
        %v981 = vadd.f32 %v919, %v980
        %982 = vmatmul.bf16.gmra.mxu0 %v886
        %v983 = vpop.f32.mrf.mxu0
        %v984 = vadd.f32 %v919, %v983
        %v985 = vpop.f32.mrf.mxu0
        %v986 = vadd.f32 %v919, %v985
        %987 = vmatmul.bf16.gmra.mxu0 %v887
        %v988 = vpop.f32.mrf.mxu0
        %v989 = vadd.f32 %v919, %v988
        %v990 = vpop.f32.mrf.mxu0
        %v991 = vadd.f32 %v919, %v990
        %992 = vmatmul.bf16.gmra.mxu0 %v888
        %v993 = vpop.f32.mrf.mxu0
        %v994 = vadd.f32 %v919, %v993
        %v995 = vpop.f32.mrf.mxu0
        %v996 = vadd.f32 %v919, %v995
        %997 = vmatmul.bf16.gmra.mxu0 %v889
        %v998 = vpop.f32.mrf.mxu0
        %v999 = vadd.f32 %v919, %v998
        %v1000 = vpop.f32.mrf.mxu0
        %v1001 = vadd.f32 %v919, %v1000
        %1002 = vmatmul.bf16.gmra.mxu0 %v890
        %v1003 = vpop.f32.mrf.mxu0
        %v1004 = vadd.f32 %v919, %v1003
        %v1005 = vpop.f32.mrf.mxu0
        %v1006 = vadd.f32 %v919, %v1005
        %1007 = vmatmul.bf16.gmra.mxu0 %v891
        %v1008 = vpop.f32.mrf.mxu0
        %v1009 = vadd.f32 %v919, %v1008
        %v1010 = vpop.f32.mrf.mxu0
        %v1011 = vadd.f32 %v919, %v1010
        %1012 = vmatmul.bf16.gmra.mxu0 %v892
        %v1013 = vpop.f32.mrf.mxu0
        %v1014 = vadd.f32 %v919, %v1013
        %v1015 = vpop.f32.mrf.mxu0
        %v1016 = vadd.f32 %v919, %v1015
        %1017 = vmatmul.bf16.gmra.mxu0 %v893
        %v1018 = vpop.f32.mrf.mxu0
        %v1019 = vadd.f32 %v919, %v1018
        %v1020 = vpop.f32.mrf.mxu0
        %v1021 = vadd.f32 %v919, %v1020
        %1022 = vmatmul.bf16.gmra.mxu0 %v894
        %v1023 = vpop.f32.mrf.mxu0
        %v1024 = vadd.f32 %v919, %v1023
        %v1025 = vpop.f32.mrf.mxu0
        %v1026 = vadd.f32 %v919, %v1025
        %1027 = vmatmul.bf16.gmra.mxu0 %v895
        %v1028 = vpop.f32.mrf.mxu0
        %v1029 = vadd.f32 %v919, %v1028
        %v1030 = vpop.f32.mrf.mxu0
        %v1031 = vadd.f32 %v919, %v1030
        %1032 = vmatmul.bf16.gmra.mxu0 %v896
        %v1033 = vpop.f32.mrf.mxu0
        %v1034 = vadd.f32 %v919, %v1033
        %v1035 = vpop.f32.mrf.mxu0
        %v1036 = vadd.f32 %v919, %v1035
        %1037 = vmatmul.bf16.gmra.mxu0 %v897
        %v1038 = vpop.f32.mrf.mxu0
        %v1039 = vadd.f32 %v919, %v1038
        %v1040 = vpop.f32.mrf.mxu0
        %v1041 = vadd.f32 %v919, %v1040
        %1042 = vmatmul.bf16.gmra.mxu0 %v898
        %v1043 = vpop.f32.mrf.mxu0
        %v1044 = vadd.f32 %v919, %v1043
        %v1045 = vpop.f32.mrf.mxu0
        %v1046 = vadd.f32 %v919, %v1045
        %1047 = vmatmul.bf16.gmra.mxu0 %v899
        %v1048 = vpop.f32.mrf.mxu0
        %v1049 = vadd.f32 %v919, %v1048
        %v1050 = vpop.f32.mrf.mxu0
        %v1051 = vadd.f32 %v919, %v1050
        %1052 = vmatmul.bf16.gmra.mxu0 %v900
        %v1053 = vpop.f32.mrf.mxu0
        %v1054 = vadd.f32 %v919, %v1053
        %v1055 = vpop.f32.mrf.mxu0
        %v1056 = vadd.f32 %v919, %v1055
        %1057 = vdwg.mxu0
        %v1058 = vtanh.pop %v979
        %v1059 = vtanh.pop %v981
        %v1060 = vtanh.pop %v984
        %v1061 = vtanh.pop %v986
        %v1062 = vtanh.pop %v989
        %v1063 = vtanh.pop %v991
        %v1064 = vtanh.pop %v994
        %v1065 = vtanh.pop %v996
        %v1066 = vtanh.pop %v999
        %v1067 = vtanh.pop %v1001
        %v1068 = vtanh.pop %v1004
        %v1069 = vtanh.pop %v1006
        %v1070 = vtanh.pop %v1009
        %v1071 = vtanh.pop %v1011
        %v1072 = vtanh.pop %v1014
        %v1073 = vtanh.pop %v1016
        %v1074 = vtanh.pop %v1019
        %v1075 = vtanh.pop %v1021
        %v1076 = vtanh.pop %v1024
        %v1077 = vtanh.pop %v1026
        %v1078 = vtanh.pop %v1029
        %v1079 = vtanh.pop %v1031
        %v1080 = vtanh.pop %v1034
        %v1081 = vtanh.pop %v1036
        %v1082 = vtanh.pop %v1039
        %v1083 = vtanh.pop %v1041
        %v1084 = vtanh.pop %v1044
        %v1085 = vtanh.pop %v1046
        %v1086 = vtanh.pop %v1049
        %v1087 = vtanh.pop %v1051
        %v1088 = vtanh.pop %v1054
        %v1089 = vtanh.pop %v1056
        %v1090 = vpack.c.bf16 %v1059, %v1058
        %v1091 = vpack.c.bf16 %v1061, %v1060
        %v1092 = vpack.c.bf16 %v1063, %v1062
        %v1093 = vpack.c.bf16 %v1065, %v1064
        %v1094 = vpack.c.bf16 %v1067, %v1066
        %v1095 = vpack.c.bf16 %v1069, %v1068
        %v1096 = vpack.c.bf16 %v1071, %v1070
        %v1097 = vpack.c.bf16 %v1073, %v1072
        %v1098 = vpack.c.bf16 %v1075, %v1074
        %v1099 = vpack.c.bf16 %v1077, %v1076
        %v1100 = vpack.c.bf16 %v1079, %v1078
        %v1101 = vpack.c.bf16 %v1081, %v1080
        %v1102 = vpack.c.bf16 %v1083, %v1082
        %v1103 = vpack.c.bf16 %v1085, %v1084
        %v1104 = vpack.c.bf16 %v1087, %v1086
        %v1105 = vpack.c.bf16 %v1089, %v1088
        %v1106 = vld [vmem:[%s7] sm:$0xf]
        %v1107 = vld [vmem:[%s7 + $0x4] sm:$0xf]
        %v1108 = vld [vmem:[%s7 + $0x8] sm:$0xf]
        %v1109 = vld [vmem:[%s7 + $0xc] sm:$0xf]
        %v1110 = vld [vmem:[%s7 + $0x10] sm:$0xf]
        %v1111 = vld [vmem:[%s7 + $0x14] sm:$0xf]
        %v1112 = vld [vmem:[%s7 + $0x18] sm:$0xf]
        %v1113 = vld [vmem:[%s7 + $0x1c] sm:$0xf]
        %v1114 = vld [vmem:[%s7 + $0x20] sm:$0xf]
        %v1115 = vld [vmem:[%s7 + $0x24] sm:$0xf]
        %v1116 = vld [vmem:[%s7 + $0x28] sm:$0xf]
        %v1117 = vld [vmem:[%s7 + $0x2c] sm:$0xf]
        %v1118 = vld [vmem:[%s7 + $0x30] sm:$0xf]
        %v1119 = vld [vmem:[%s7 + $0x34] sm:$0xf]
        %v1120 = vld [vmem:[%s7 + $0x38] sm:$0xf]
        %v1121 = vld [vmem:[%s7 + $0x3c] sm:$0xf]
        %v1122 = vld [vmem:[%s8] sm:$0x1]
        %v1124 = vperm.slane %v1122, 0
        %v1142 = vunpack.c.l.b16 %v1106
        %v1143 = vunpack.c.l.b16 %v1107
        %v1144 = vunpack.c.l.b16 %v1108
        %v1145 = vunpack.c.l.b16 %v1109
        %v1146 = vunpack.c.l.b16 %v1110
        %v1147 = vunpack.c.l.b16 %v1111
        %v1148 = vunpack.c.l.b16 %v1112
        %v1149 = vunpack.c.l.b16 %v1113
        %v1150 = vunpack.c.l.b16 %v1114
        %v1151 = vunpack.c.l.b16 %v1115
        %v1152 = vunpack.c.l.b16 %v1116
        %v1153 = vunpack.c.l.b16 %v1117
        %v1154 = vunpack.c.l.b16 %v1118
        %v1155 = vunpack.c.l.b16 %v1119
        %v1156 = vunpack.c.l.b16 %v1120
        %v1157 = vunpack.c.l.b16 %v1121
        %v1158 = vpack.c.b16 %v1143, %v1142
        %v1159 = vpack.c.b16 %v1145, %v1144
        %v1160 = vpack.c.b16 %v1147, %v1146
        %v1161 = vpack.c.b16 %v1149, %v1148
        %v1162 = vpack.c.b16 %v1151, %v1150
        %v1163 = vpack.c.b16 %v1153, %v1152
        %v1164 = vpack.c.b16 %v1155, %v1154
        %v1165 = vpack.c.b16 %v1157, %v1156
        %1174 = vmatpush.bf16.msra.mxu0 %v1165
        %1175 = vmatpush.bf16.msra.mxu0 %v1164
        %1176 = vmatpush.bf16.msra.mxu0 %v1163
        %1177 = vmatpush.bf16.msra.mxu0 %v1162
        %1178 = vmatpush.bf16.msra.mxu0 %v1161
        %1179 = vmatpush.bf16.msra.mxu0 %v1160
        %1180 = vmatpush.bf16.msra.mxu0 %v1159
        %1181 = vmatpush.bf16.msra.mxu0 %v1158
        %1182 = vmatmul.bf16.gmra.mxu0 %v1090
        %v1183 = vpop.f32.mrf.mxu0
        %v1184 = vadd.f32 %v1124, %v1183
        %v1185 = vpop.f32.mrf.mxu0
        %v1186 = vadd.f32 %v1124, %v1185
        %1187 = vmatmul.bf16.gmra.mxu0 %v1091
        %v1188 = vpop.f32.mrf.mxu0
        %v1189 = vadd.f32 %v1124, %v1188
        %v1190 = vpop.f32.mrf.mxu0
        %v1191 = vadd.f32 %v1124, %v1190
        %1192 = vmatmul.bf16.gmra.mxu0 %v1092
        %v1193 = vpop.f32.mrf.mxu0
        %v1194 = vadd.f32 %v1124, %v1193
        %v1195 = vpop.f32.mrf.mxu0
        %v1196 = vadd.f32 %v1124, %v1195
        %1197 = vmatmul.bf16.gmra.mxu0 %v1093
        %v1198 = vpop.f32.mrf.mxu0
        %v1199 = vadd.f32 %v1124, %v1198
        %v1200 = vpop.f32.mrf.mxu0
        %v1201 = vadd.f32 %v1124, %v1200
        %1202 = vmatmul.bf16.gmra.mxu0 %v1094
        %v1203 = vpop.f32.mrf.mxu0
        %v1204 = vadd.f32 %v1124, %v1203
        %v1205 = vpop.f32.mrf.mxu0
        %v1206 = vadd.f32 %v1124, %v1205
        %1207 = vmatmul.bf16.gmra.mxu0 %v1095
        %v1208 = vpop.f32.mrf.mxu0
        %v1209 = vadd.f32 %v1124, %v1208
        %v1210 = vpop.f32.mrf.mxu0
        %v1211 = vadd.f32 %v1124, %v1210
        %1212 = vmatmul.bf16.gmra.mxu0 %v1096
        %v1213 = vpop.f32.mrf.mxu0
        %v1214 = vadd.f32 %v1124, %v1213
        %v1215 = vpop.f32.mrf.mxu0
        %v1216 = vadd.f32 %v1124, %v1215
        %1217 = vmatmul.bf16.gmra.mxu0 %v1097
        %v1218 = vpop.f32.mrf.mxu0
        %v1219 = vadd.f32 %v1124, %v1218
        %v1220 = vpop.f32.mrf.mxu0
        %v1221 = vadd.f32 %v1124, %v1220
        %1222 = vmatmul.bf16.gmra.mxu0 %v1098
        %v1223 = vpop.f32.mrf.mxu0
        %v1224 = vadd.f32 %v1124, %v1223
        %v1225 = vpop.f32.mrf.mxu0
        %v1226 = vadd.f32 %v1124, %v1225
        %1227 = vmatmul.bf16.gmra.mxu0 %v1099
        %v1228 = vpop.f32.mrf.mxu0
        %v1229 = vadd.f32 %v1124, %v1228
        %v1230 = vpop.f32.mrf.mxu0
        %v1231 = vadd.f32 %v1124, %v1230
        %1232 = vmatmul.bf16.gmra.mxu0 %v1100
        %v1233 = vpop.f32.mrf.mxu0
        %v1234 = vadd.f32 %v1124, %v1233
        %v1235 = vpop.f32.mrf.mxu0
        %v1236 = vadd.f32 %v1124, %v1235
        %1237 = vmatmul.bf16.gmra.mxu0 %v1101
        %v1238 = vpop.f32.mrf.mxu0
        %v1239 = vadd.f32 %v1124, %v1238
        %v1240 = vpop.f32.mrf.mxu0
        %v1241 = vadd.f32 %v1124, %v1240
        %1242 = vmatmul.bf16.gmra.mxu0 %v1102
        %v1243 = vpop.f32.mrf.mxu0
        %v1244 = vadd.f32 %v1124, %v1243
        %v1245 = vpop.f32.mrf.mxu0
        %v1246 = vadd.f32 %v1124, %v1245
        %1247 = vmatmul.bf16.gmra.mxu0 %v1103
        %v1248 = vpop.f32.mrf.mxu0
        %v1249 = vadd.f32 %v1124, %v1248
        %v1250 = vpop.f32.mrf.mxu0
        %v1251 = vadd.f32 %v1124, %v1250
        %1252 = vmatmul.bf16.gmra.mxu0 %v1104
        %v1253 = vpop.f32.mrf.mxu0
        %v1254 = vadd.f32 %v1124, %v1253
        %v1255 = vpop.f32.mrf.mxu0
        %v1256 = vadd.f32 %v1124, %v1255
        %1257 = vmatmul.bf16.gmra.mxu0 %v1105
        %v1258 = vpop.f32.mrf.mxu0
        %v1259 = vadd.f32 %v1124, %v1258
        %v1260 = vpop.f32.mrf.mxu0
        %v1261 = vadd.f32 %v1124, %v1260
        %1262 = vdwg.mxu0
        %v1263 = vtanh.pop %v1184
        %v1264 = vtanh.pop %v1186
        %v1265 = vtanh.pop %v1189
        %v1266 = vtanh.pop %v1191
        %v1267 = vtanh.pop %v1194
        %v1268 = vtanh.pop %v1196
        %v1269 = vtanh.pop %v1199
        %v1270 = vtanh.pop %v1201
        %v1271 = vtanh.pop %v1204
        %v1272 = vtanh.pop %v1206
        %v1273 = vtanh.pop %v1209
        %v1274 = vtanh.pop %v1211
        %v1275 = vtanh.pop %v1214
        %v1276 = vtanh.pop %v1216
        %v1277 = vtanh.pop %v1219
        %v1278 = vtanh.pop %v1221
        %v1279 = vtanh.pop %v1224
        %v1280 = vtanh.pop %v1226
        %v1281 = vtanh.pop %v1229
        %v1282 = vtanh.pop %v1231
        %v1283 = vtanh.pop %v1234
        %v1284 = vtanh.pop %v1236
        %v1285 = vtanh.pop %v1239
        %v1286 = vtanh.pop %v1241
        %v1287 = vtanh.pop %v1244
        %v1288 = vtanh.pop %v1246
        %v1289 = vtanh.pop %v1249
        %v1290 = vtanh.pop %v1251
        %v1291 = vtanh.pop %v1254
        %v1292 = vtanh.pop %v1256
        %v1293 = vtanh.pop %v1259
        %v1294 = vtanh.pop %v1261
        %v1295 = vpack.c.bf16 %v1264, %v1263
        %v1296 = vpack.c.bf16 %v1266, %v1265
        %v1297 = vpack.c.bf16 %v1268, %v1267
        %v1298 = vpack.c.bf16 %v1270, %v1269
        %v1299 = vpack.c.bf16 %v1272, %v1271
        %v1300 = vpack.c.bf16 %v1274, %v1273
        %v1301 = vpack.c.bf16 %v1276, %v1275
        %v1302 = vpack.c.bf16 %v1278, %v1277
        %v1303 = vpack.c.bf16 %v1280, %v1279
        %v1304 = vpack.c.bf16 %v1282, %v1281
        %v1305 = vpack.c.bf16 %v1284, %v1283
        %v1306 = vpack.c.bf16 %v1286, %v1285
        %v1307 = vpack.c.bf16 %v1288, %v1287
        %v1308 = vpack.c.bf16 %v1290, %v1289
        %v1309 = vpack.c.bf16 %v1292, %v1291
        %v1310 = vpack.c.bf16 %v1294, %v1293
        %v1311 = vld [vmem:[%s9] sm:$0xf]
        %v1312 = vld [vmem:[%s9 + $0x4] sm:$0xf]
        %v1313 = vld [vmem:[%s9 + $0x8] sm:$0xf]
        %v1314 = vld [vmem:[%s9 + $0xc] sm:$0xf]
        %v1315 = vld [vmem:[%s9 + $0x10] sm:$0xf]
        %v1316 = vld [vmem:[%s9 + $0x14] sm:$0xf]
        %v1317 = vld [vmem:[%s9 + $0x18] sm:$0xf]
        %v1318 = vld [vmem:[%s9 + $0x1c] sm:$0xf]
        %v1319 = vld [vmem:[%s9 + $0x20] sm:$0xf]
        %v1320 = vld [vmem:[%s9 + $0x24] sm:$0xf]
        %v1321 = vld [vmem:[%s9 + $0x28] sm:$0xf]
        %v1322 = vld [vmem:[%s9 + $0x2c] sm:$0xf]
        %v1323 = vld [vmem:[%s9 + $0x30] sm:$0xf]
        %v1324 = vld [vmem:[%s9 + $0x34] sm:$0xf]
        %v1325 = vld [vmem:[%s9 + $0x38] sm:$0xf]
        %v1326 = vld [vmem:[%s9 + $0x3c] sm:$0xf]
        %v1327 = vld [vmem:[%s10] sm:$0x1]
        %v1329 = vperm.slane %v1327, 0
        %v1347 = vunpack.c.l.b16 %v1311
        %v1348 = vunpack.c.l.b16 %v1312
        %v1349 = vunpack.c.l.b16 %v1313
        %v1350 = vunpack.c.l.b16 %v1314
        %v1351 = vunpack.c.l.b16 %v1315
        %v1352 = vunpack.c.l.b16 %v1316
        %v1353 = vunpack.c.l.b16 %v1317
        %v1354 = vunpack.c.l.b16 %v1318
        %v1355 = vunpack.c.l.b16 %v1319
        %v1356 = vunpack.c.l.b16 %v1320
        %v1357 = vunpack.c.l.b16 %v1321
        %v1358 = vunpack.c.l.b16 %v1322
        %v1359 = vunpack.c.l.b16 %v1323
        %v1360 = vunpack.c.l.b16 %v1324
        %v1361 = vunpack.c.l.b16 %v1325
        %v1362 = vunpack.c.l.b16 %v1326
        %v1363 = vpack.c.b16 %v1348, %v1347
        %v1364 = vpack.c.b16 %v1350, %v1349
        %v1365 = vpack.c.b16 %v1352, %v1351
        %v1366 = vpack.c.b16 %v1354, %v1353
        %v1367 = vpack.c.b16 %v1356, %v1355
        %v1368 = vpack.c.b16 %v1358, %v1357
        %v1369 = vpack.c.b16 %v1360, %v1359
        %v1370 = vpack.c.b16 %v1362, %v1361
        %1379 = vmatpush.bf16.msra.mxu0 %v1370
        %1380 = vmatpush.bf16.msra.mxu0 %v1369
        %1381 = vmatpush.bf16.msra.mxu0 %v1368
        %1382 = vmatpush.bf16.msra.mxu0 %v1367
        %1383 = vmatpush.bf16.msra.mxu0 %v1366
        %1384 = vmatpush.bf16.msra.mxu0 %v1365
        %1385 = vmatpush.bf16.msra.mxu0 %v1364
        %1386 = vmatpush.bf16.msra.mxu0 %v1363
        %1387 = vmatmul.bf16.gmra.mxu0 %v1295
        %v1388 = vpop.f32.mrf.mxu0
        %v1389 = vadd.f32 %v1329, %v1388
        %v1390 = vpop.f32.mrf.mxu0
        %v1391 = vadd.f32 %v1329, %v1390
        %1392 = vmatmul.bf16.gmra.mxu0 %v1296
        %v1393 = vpop.f32.mrf.mxu0
        %v1394 = vadd.f32 %v1329, %v1393
        %v1395 = vpop.f32.mrf.mxu0
        %v1396 = vadd.f32 %v1329, %v1395
        %1397 = vmatmul.bf16.gmra.mxu0 %v1297
        %v1398 = vpop.f32.mrf.mxu0
        %v1399 = vadd.f32 %v1329, %v1398
        %v1400 = vpop.f32.mrf.mxu0
        %v1401 = vadd.f32 %v1329, %v1400
        %1402 = vmatmul.bf16.gmra.mxu0 %v1298
        %v1403 = vpop.f32.mrf.mxu0
        %v1404 = vadd.f32 %v1329, %v1403
        %v1405 = vpop.f32.mrf.mxu0
        %v1406 = vadd.f32 %v1329, %v1405
        %1407 = vmatmul.bf16.gmra.mxu0 %v1299
        %v1408 = vpop.f32.mrf.mxu0
        %v1409 = vadd.f32 %v1329, %v1408
        %v1410 = vpop.f32.mrf.mxu0
        %v1411 = vadd.f32 %v1329, %v1410
        %1412 = vmatmul.bf16.gmra.mxu0 %v1300
        %v1413 = vpop.f32.mrf.mxu0
        %v1414 = vadd.f32 %v1329, %v1413
        %v1415 = vpop.f32.mrf.mxu0
        %v1416 = vadd.f32 %v1329, %v1415
        %1417 = vmatmul.bf16.gmra.mxu0 %v1301
        %v1418 = vpop.f32.mrf.mxu0
        %v1419 = vadd.f32 %v1329, %v1418
        %v1420 = vpop.f32.mrf.mxu0
        %v1421 = vadd.f32 %v1329, %v1420
        %1422 = vmatmul.bf16.gmra.mxu0 %v1302
        %v1423 = vpop.f32.mrf.mxu0
        %v1424 = vadd.f32 %v1329, %v1423
        %v1425 = vpop.f32.mrf.mxu0
        %v1426 = vadd.f32 %v1329, %v1425
        %1427 = vmatmul.bf16.gmra.mxu0 %v1303
        %v1428 = vpop.f32.mrf.mxu0
        %v1429 = vadd.f32 %v1329, %v1428
        %v1430 = vpop.f32.mrf.mxu0
        %v1431 = vadd.f32 %v1329, %v1430
        %1432 = vmatmul.bf16.gmra.mxu0 %v1304
        %v1433 = vpop.f32.mrf.mxu0
        %v1434 = vadd.f32 %v1329, %v1433
        %v1435 = vpop.f32.mrf.mxu0
        %v1436 = vadd.f32 %v1329, %v1435
        %1437 = vmatmul.bf16.gmra.mxu0 %v1305
        %v1438 = vpop.f32.mrf.mxu0
        %v1439 = vadd.f32 %v1329, %v1438
        %v1440 = vpop.f32.mrf.mxu0
        %v1441 = vadd.f32 %v1329, %v1440
        %1442 = vmatmul.bf16.gmra.mxu0 %v1306
        %v1443 = vpop.f32.mrf.mxu0
        %v1444 = vadd.f32 %v1329, %v1443
        %v1445 = vpop.f32.mrf.mxu0
        %v1446 = vadd.f32 %v1329, %v1445
        %1447 = vmatmul.bf16.gmra.mxu0 %v1307
        %v1448 = vpop.f32.mrf.mxu0
        %v1449 = vadd.f32 %v1329, %v1448
        %v1450 = vpop.f32.mrf.mxu0
        %v1451 = vadd.f32 %v1329, %v1450
        %1452 = vmatmul.bf16.gmra.mxu0 %v1308
        %v1453 = vpop.f32.mrf.mxu0
        %v1454 = vadd.f32 %v1329, %v1453
        %v1455 = vpop.f32.mrf.mxu0
        %v1456 = vadd.f32 %v1329, %v1455
        %1457 = vmatmul.bf16.gmra.mxu0 %v1309
        %v1458 = vpop.f32.mrf.mxu0
        %v1459 = vadd.f32 %v1329, %v1458
        %v1460 = vpop.f32.mrf.mxu0
        %v1461 = vadd.f32 %v1329, %v1460
        %1462 = vmatmul.bf16.gmra.mxu0 %v1310
        %v1463 = vpop.f32.mrf.mxu0
        %v1464 = vadd.f32 %v1329, %v1463
        %v1465 = vpop.f32.mrf.mxu0
        %v1466 = vadd.f32 %v1329, %v1465
        %1467 = vdwg.mxu0
        %1468 = vst [vmem:[%s380] sm:$0xff] %v1389
        %1469 = vst [vmem:[%s380 + $0x8] sm:$0xff] %v1391
        %1470 = vst [vmem:[%s380 + $0x10] sm:$0xff] %v1394
        %1471 = vst [vmem:[%s380 + $0x18] sm:$0xff] %v1396
        %1472 = vst [vmem:[%s380 + $0x20] sm:$0xff] %v1399
        %1473 = vst [vmem:[%s380 + $0x28] sm:$0xff] %v1401
        %1474 = vst [vmem:[%s380 + $0x30] sm:$0xff] %v1404
        %1475 = vst [vmem:[%s380 + $0x38] sm:$0xff] %v1406
        %1476 = vst [vmem:[%s380 + $0x40] sm:$0xff] %v1409
        %1477 = vst [vmem:[%s380 + $0x48] sm:$0xff] %v1411
        %1478 = vst [vmem:[%s380 + $0x50] sm:$0xff] %v1414
        %1479 = vst [vmem:[%s380 + $0x58] sm:$0xff] %v1416
        %1480 = vst [vmem:[%s380 + $0x60] sm:$0xff] %v1419
        %1481 = vst [vmem:[%s380 + $0x68] sm:$0xff] %v1421
        %1482 = vst [vmem:[%s380 + $0x70] sm:$0xff] %v1424
        %1483 = vst [vmem:[%s380 + $0x78] sm:$0xff] %v1426
        %1484 = vst [vmem:[%s380 + $0x80] sm:$0xff] %v1429
        %1485 = vst [vmem:[%s380 + $0x88] sm:$0xff] %v1431
        %1486 = vst [vmem:[%s380 + $0x90] sm:$0xff] %v1434
        %1487 = vst [vmem:[%s380 + $0x98] sm:$0xff] %v1436
        %1488 = vst [vmem:[%s380 + $0xa0] sm:$0xff] %v1439
        %1489 = vst [vmem:[%s380 + $0xa8] sm:$0xff] %v1441
        %1490 = vst [vmem:[%s380 + $0xb0] sm:$0xff] %v1444
        %1491 = vst [vmem:[%s380 + $0xb8] sm:$0xff] %v1446
        %1492 = vst [vmem:[%s380 + $0xc0] sm:$0xff] %v1449
        %1493 = vst [vmem:[%s380 + $0xc8] sm:$0xff] %v1451
        %1494 = vst [vmem:[%s380 + $0xd0] sm:$0xff] %v1454
        %1495 = vst [vmem:[%s380 + $0xd8] sm:$0xff] %v1456
        %1496 = vst [vmem:[%s380 + $0xe0] sm:$0xff] %v1459
        %1497 = vst [vmem:[%s380 + $0xe8] sm:$0xff] %v1461
        %1498 = vst [vmem:[%s380 + $0xf0] sm:$0xff] %v1464
        %1499 = vst [vmem:[%s380 + $0xf8] sm:$0xff] %v1466
        %s1500 = sand.u32 %s269, 1
        %s1501 = scalar_lea.sflag [#allocation3], %s1500
        %s1502 = sand.u32 %s269, 1
        %s1503 = smul.addr %s1502, 256
        %s1504 = scalar_lea.vmem [#allocation2], %s1503
        // Predicated region
        $region65: #{tpu_custom_call.1} parent=63 // pred_check
          %p1505 = pneg %p279
        $region66: #{tpu_custom_call.1} parent=63 // pred_check_branch
          %1507 = sbr.rel (%p1505) target = $region68
        $region67: #{tpu_custom_call.1} parent=63 // pred_region
          %s1508 = smul.u32 32, %s25
          %1510 = vsyncadd %s1501, 0
          %s1511 = smul.addr %s1508, 8
          %s1512 = scalar_lea.hbm %s11, %s1511
          %s1513 = sshll.u32 %s1504, 4
          %s1514 = int_to_ptr.vmem [resolvable:$true] %s1513
          %s1515 = sshll.u32 %s1512, 4
          %s1516 = int_to_ptr.hbm [resolvable:$true] %s1515
          %1521 = dma.vmem_to_hbm [thread:$0]  %s1514, 4096, %s1516, %s1501, 128, 128, 8
        $region68: #{tpu_custom_call.1} parent=63 // pred_fallthru
          _
      $region64: #{tpu_custom_call.1} parent=5 // pred_fallthru
        _
      %p1522 = scmp.le.s32.totalorder 2, %s20
      // Predicated region
      $region69: #{tpu_custom_call.1} parent=5 // pred_check
        %p1523 = pneg %p1522
      $region70: #{tpu_custom_call.1} parent=5 // pred_check_branch
        %1525 = sbr.rel (%p1523) target = $region72
      $region71: #{tpu_custom_call.1} parent=5 // pred_region
        %s1526 = ssub.s32 %s20, 2
        // Predicated region
        $region73: #{tpu_custom_call.1} parent=71 // pred_check
          %p1527 = pneg %p285
        $region74: #{tpu_custom_call.1} parent=71 // pred_check_branch
          %1529 = sbr.rel (%p1527) target = $region76
        $region75: #{tpu_custom_call.1} parent=71 // pred_region
          %s1530 = sand.u32 %s270, 1
          %s1531 = scalar_lea.sflag [#allocation3], %s1530
          %s1532 = sand.u32 %s270, 1
          %s1533 = smul.addr %s1532, 256
          %s1534 = scalar_lea.vmem [#allocation2], %s1533
          %1536 = dma.done %s1531, 4096
        $region76: #{tpu_custom_call.1} parent=71 // pred_fallthru
          _
      $region72: #{tpu_custom_call.1} parent=5 // pred_fallthru
        _
    $region6: #{tpu_custom_call.1} parent=1 // loop_footer
      %s24 = sadd.s32 1, %s20
    $region7: #{tpu_custom_call.1} parent=1 // loop_footer_branch
      %19 = sbr.rel target = $region3
    $region8: #{tpu_custom_call.1} parent=1 // loop_exit
      _
    %1537 = vsyncpa [#allocation3], 1
    %s1538 = scalar_lea.sflag [#allocation3], 1
    %1539 = vsyncpa %s1538, 1

</llo_original>
